<compile_context>
chip_gen: v6e
topology: v6e:2x2x1
jax: 0.10.0
libtpu: 0.0.40
codegen_flags: <defaults>
</compile_context>

<pallas_src>
import functools
import math

import jax
import jax.numpy as jnp
from jax.experimental import pallas as pl
from jax.experimental.pallas import tpu as pltpu


def _leaky_relu(x, slope=0.01):
    return jnp.where(x >= 0.0, x, slope * x)


def topic_aggregation_kernel(
    # batch-block data
    qw_ref, qf_ref, qm_ref, kw_ref, kf_ref, km_ref,
    # fused GatedTrans params (query / key), topic-gate params
    wq_ref, bq_ref, wk_ref, bk_ref, wg_ref, bg_ref,
    # output
    out_ref,
    *,
    compute_dtype,
):
    f32 = jnp.float32
    Bb, Q, E = qw_ref.shape
    K = kw_ref.shape[1]
    H2 = qf_ref.shape[-1]
    H = H2 // 2
    E2 = out_ref.shape[-1]

    def mm(a, b):
        # MXU matmul: compute_dtype operands, f32 accumulation.
        return jnp.dot(a.astype(compute_dtype), b.astype(compute_dtype),
                       preferred_element_type=f32)

    # --- GatedTrans (fused [y|g] weights -> one matmul per input) ---
    qf2 = qf_ref[...].reshape(Bb * Q, H2)                       # (Bb*Q, 2H)
    hq = mm(qf2, wq_ref[...]) + bq_ref[...]
    q_emb = (jnp.tanh(hq[:, :H]) * _leaky_relu(hq[:, H:])).reshape(Bb, Q, H)

    kf2 = kf_ref[...].reshape(Bb * K, H2)                       # (Bb*K, 2H)
    hk = mm(kf2, wk_ref[...]) + bk_ref[...]
    k_emb = (jnp.tanh(hk[:, :H]) * _leaky_relu(hk[:, H:])).reshape(Bb, K, H)

    # --- transpose-free QK^T scores + masked softmax over keys ---
    # Masks are strictly 0/1: the query mask is applied once after the weighted
    # sum (equivalent to pre-masking q_emb), the key mask is applied exactly once.
    km_row = km_ref[...]                                        # (Bb, 1, K) f32
    scores = jnp.einsum('bqh,bkh->bqk',
                        q_emb.astype(compute_dtype),
                        k_emb.astype(compute_dtype),
                        preferred_element_type=f32)             # (Bb, Q, K) f32
    masked = scores * km_row + (km_row - 1.0) * 1e13
    masked = masked - jnp.max(masked, axis=-1, keepdims=True)
    exps = jnp.exp(masked)
    inv_den = pl.reciprocal(jnp.sum(exps, axis=-1, keepdims=True), approx=False)
    attn = exps * inv_den                                       # (Bb, Q, K) f32

    # --- weighted sum over key words, gated by the query mask ---
    qm = qm_ref[...]                                            # (Bb, Q, 1) f32
    attn_query = jnp.einsum('bqk,bke->bqe',
                            attn.astype(compute_dtype),
                            kw_ref[...].astype(compute_dtype),
                            preferred_element_type=f32) * qm    # (Bb, Q, E) f32

    # --- topic gate: one K=2E matmul on cat, one lane-dense 2E-wide store ---
    cat = jnp.concatenate(
        [attn_query.reshape(Bb * Q, E),
         qw_ref[...].reshape(Bb * Q, E).astype(f32)], axis=-1)  # (Bb*Q, 2E)
    gate = jax.nn.sigmoid(mm(cat, wg_ref[...]) + bg_ref[...])
    out_ref[...] = (gate * cat).reshape(Bb, Q, E2).astype(out_ref.dtype)


def _pick_batch_block(batch, target):
    """Largest block <= target, preferring a divisor of `batch` (no host-side pad)."""
    target = max(1, min(int(target), batch))
    if batch % target == 0:
        return target
    for bb in range(target, max(target // 2, 1) - 1, -1):
        if batch % bb == 0:
            return bb
    return target     # no reasonable divisor: fall back to padding


def _padded_block_bytes(shape, dtype):
    """Rough VMEM bytes of one block: pad last dim to 128 lanes, 2nd-last to 8 sublanes."""
    s = list(shape)
    s[-1] = -(-s[-1] // 128) * 128
    if len(s) >= 2:
        s[-2] = -(-s[-2] // 8) * 8
    return math.prod(s) * jnp.dtype(dtype).itemsize


def topic_aggregation(query_word, query_feature, query_mask,
                      key_word, key_feature, key_mask, params,
                      block_batches=128, compute_dtype=jnp.float32,
                      out_dtype=None):
    """TopicAggregation forward (eval mode). Masks must be strictly 0/1."""
    B, Q, E = query_word.shape
    _, K, _ = key_word.shape
    H2 = query_feature.shape[-1]        # 2 * hidden_size
    E2 = 2 * E
    if out_dtype is None:
        out_dtype = compute_dtype

    (wqy, bqy, wqg, bqg, wky, bky, wkg, bkg, wg, bg) = params

    # Fuse GatedTrans y/g weight pairs -> one MXU pass each; biases stay f32.
    wq_fused = jnp.concatenate([wqy, wqg], axis=1).astype(compute_dtype)   # (2H, 2H)
    bq_fused = jnp.concatenate([bqy, bqg], axis=1).astype(jnp.float32)     # (1, 2H)
    wk_fused = jnp.concatenate([wky, wkg], axis=1).astype(compute_dtype)   # (2H, 2H)
    bk_fused = jnp.concatenate([bky, bkg], axis=1).astype(jnp.float32)     # (1, 2H)
    wg_c = wg.astype(compute_dtype)                                        # (2E, 2E)
    bg_c = bg.astype(jnp.float32)                                          # (1, 2E)

    # Activations in compute dtype (bf16 halves HBM traffic on v6e/v7x).
    qw = query_word.astype(compute_dtype)
    qf = query_feature.astype(compute_dtype)
    kw = key_word.astype(compute_dtype)
    kf = key_feature.astype(compute_dtype)
    qm3 = query_mask.reshape(B, Q, 1).astype(jnp.float32)
    km3 = key_mask.reshape(B, 1, K).astype(jnp.float32)

    # Batch blocking: prefer a block that divides B (avoids the host-side pad copy).
    Bb = _pick_batch_block(B, block_batches)
    # Megacore (v7x): give the "parallel" batch-block axis >= 2 steps when B is big
    # enough; a tiny batch is better served by one block.
    if B >= 16 and pl.cdiv(B, Bb) < 2:
        Bb = _pick_batch_block(B, pl.cdiv(B, 2))
    n_blocks = pl.cdiv(B, Bb)
    Bp = n_blocks * Bb

    if Bp != B:
        # TODO(synk): handle the ragged last block in-kernel instead of padding.
        def pad_b(x):
            return jnp.pad(x, [(0, Bp - B)] + [(0, 0)] * (x.ndim - 1))
        qw, qf, qm3, kw, kf, km3 = (pad_b(t) for t in (qw, qf, qm3, kw, kf, km3))

    # VMEM budget: double-buffered in/out blocks + params, 2x slack for temporaries;
    # clamped to [32 MiB, 64 MiB] (v7x has only 64 MiB VMEM per TensorCore).
    blk_bytes = sum(_padded_block_bytes(s, d) for s, d in [
        ((Bb, Q, E), compute_dtype), ((Bb, Q, H2), compute_dtype),
        ((Bb, Q, 1), jnp.float32),   ((Bb, K, E), compute_dtype),
        ((Bb, K, H2), compute_dtype), ((Bb, 1, K), jnp.float32),
        ((Bb, Q, E2), out_dtype)])
    prm_bytes = sum(_padded_block_bytes(p.shape, p.dtype) for p in
                    (wq_fused, bq_fused, wk_fused, bk_fused, wg_c, bg_c))
    vmem_limit = int(min(64 << 20, max(32 << 20, 2 * (2 * blk_bytes + 2 * prm_bytes))))

    kernel = functools.partial(topic_aggregation_kernel, compute_dtype=compute_dtype)

    def build_call(buffer_params_once):
        pmode = dict(pipeline_mode=pl.Buffered(1)) if buffer_params_once else {}

        def data_spec(*dims):
            nd = len(dims)
            return pl.BlockSpec((Bb,) + dims, lambda b: (b,) + (0,) * nd)

        def param_spec(r, c):
            return pl.BlockSpec((r, c), lambda b: (0, 0), **pmode)

        grid_spec = pltpu.PrefetchScalarGridSpec(
            num_scalar_prefetch=0,
            grid=(n_blocks,),
            in_specs=[
                data_spec(Q, E),        # query_word
                data_spec(Q, H2),       # query_feature
                data_spec(Q, 1),        # query_mask  (B, Q, 1)
                data_spec(K, E),        # key_word
                data_spec(K, H2),       # key_feature
                data_spec(1, K),        # key_mask    (B, 1, K)
                param_spec(H2, H2), param_spec(1, H2),   # wq_fused, bq_fused
                param_spec(H2, H2), param_spec(1, H2),   # wk_fused, bk_fused
                param_spec(E2, E2), param_spec(1, E2),   # wg, bg
            ],
            out_specs=pl.BlockSpec((Bb, Q, E2), lambda b: (b, 0, 0)),
        )
        return pl.pallas_call(
            kernel,
            out_shape=jax.ShapeDtypeStruct((Bp, Q, E2), out_dtype),
            grid_spec=grid_spec,
            compiler_params=pltpu.CompilerParams(
                dimension_semantics=("parallel",),
                vmem_limit_bytes=vmem_limit),
        )

    args = (qw, qf, qm3, kw, kf, km3,
            wq_fused, bq_fused, wk_fused, bk_fused, wg_c, bg_c)
    try:
        out = build_call(True)(*args)
    except Exception:   # Buffered(1) unsupported on this version: double-buffer params
        out = build_call(False)(*args)

    return out[:B] if Bp != B else out


def init_params(key, hidden_size, embedding_size):
    """Kaiming-uniform-like weights stored as (in, out); zero biases (matches PyTorch init)."""
    def kaiming(k, in_dim, out_dim):
        bound = (6.0 / in_dim) ** 0.5
        return jax.random.uniform(k, (in_dim, out_dim), jnp.float32, -bound, bound)

    H, E = hidden_size, embedding_size
    ks = jax.random.split(key, 5)
    wqy = kaiming(ks[0], 2 * H, H); bqy = jnp.zeros((1, H), jnp.float32)
    wqg = kaiming(ks[1], 2 * H, H); bqg = jnp.zeros((1, H), jnp.float32)
    wky = kaiming(ks[2], 2 * H, H); bky = jnp.zeros((1, H), jnp.float32)
    wkg = kaiming(ks[3], 2 * H, H); bkg = jnp.zeros((1, H), jnp.float32)
    wg = kaiming(ks[4], 2 * E, 2 * E); bg = jnp.zeros((1, 2 * E), jnp.float32)
    return (wqy, bqy, wqg, bqg, wky, bky, wkg, bkg, wg, bg)


def reference_forward(query_word, query_feature, query_mask,
                      key_word, key_feature, key_mask, params):
    """Pure-JAX reference mirroring the PyTorch forward (eval mode), full-f32 matmuls."""
    (wqy, bqy, wqg, bqg, wky, bky, wkg, bkg, wg, bg) = params
    P = jax.lax.Precision.HIGHEST
    leaky = lambda x: jnp.where(x >= 0.0, x, 0.01 * x)
    q_emb = (jnp.tanh(jnp.dot(query_feature, wqy, precision=P) + bqy)
             * leaky(jnp.dot(query_feature, wqg, precision=P) + bqg))
    k_emb = (jnp.tanh(jnp.dot(key_feature, wky, precision=P) + bky)
             * leaky(jnp.dot(key_feature, wkg, precision=P) + bkg))
    scores = jnp.einsum('bqh,bkh->bqk',
                        q_emb * query_mask[..., None],
                        k_emb * key_mask[..., None], precision=P)
    m = key_mask[:, None, :]
    s = scores * m + (m - 1.0) * 1e13
    attn = jax.nn.softmax(s, axis=-1)
    attn_query = jnp.einsum('bqk,bke->bqe', attn, key_word,
                            precision=P) * query_mask[..., None]
    cat = jnp.concatenate([attn_query, query_word], axis=-1)
    gate = jax.nn.sigmoid(jnp.dot(cat, wg, precision=P) + bg)
    return gate * cat


if __name__ == "__main__":
    B = 2
    Q = 8          # query seq len
    K = 8          # key seq len
    H = 32         # hidden_size  (bilstm feature dim = 2H = 64)
    E = 64         # embedding_size (topic-gate dim = 2E = 128)

    root = jax.random.PRNGKey(0)
    k_qw, k_qf, k_kw, k_kf, k_p = jax.random.split(root, 5)

    query_word = jax.random.normal(k_qw, (B, Q, E), jnp.float32)
    query_feature = jax.random.normal(k_qf, (B, Q, 2 * H), jnp.float32)
    key_word = jax.random.normal(k_kw, (B, K, E), jnp.float32)
    key_feature = jax.random.normal(k_kf, (B, K, 2 * H), jnp.float32)

    # strictly 0/1 float masks: last two query positions and last key position padded
    query_mask = jnp.ones((B, Q), jnp.float32).at[:, Q - 2:].set(0.0)
    key_mask = jnp.ones((B, K), jnp.float32).at[:, K - 1:].set(0.0)

    params = init_params(k_p, H, E)

    ref = reference_forward(query_word, query_feature, query_mask,
                            key_word, key_feature, key_mask, params)

    # f32 path: exact-reciprocal softmax + reference-order gate matmul -> tight match.
    out = topic_aggregation(query_word, query_feature, query_mask,
                            key_word, key_feature, key_mask, params)
    out = jax.block_until_ready(out)
    assert out.shape == (B, Q, 2 * E)
    assert out.dtype == jnp.float32
    assert jnp.allclose(out, ref, rtol=1e-3, atol=1e-3), \
        "Pallas f32 output mismatch vs JAX reference"

    # bf16 MXU-operand / bf16-I/O path (halves HBM traffic on v6e/v7x):
    # sanity-checked with a loose relative-error bound against the f32 reference.
    out_bf16 = topic_aggregation(query_word, query_feature, query_mask,
                                 key_word, key_feature, key_mask, params,
                                 compute_dtype=jnp.bfloat16)
    out_bf16 = jax.block_until_ready(out_bf16).astype(jnp.float32)
    assert out_bf16.shape == (B, Q, 2 * E)
    assert bool(jnp.isfinite(out_bf16).all())
    rel_err = jnp.linalg.norm(out_bf16 - ref) / jnp.linalg.norm(ref)
    assert float(rel_err) < 0.1, "Pallas bf16 output too far from f32 reference"

    print("KERNEL_OK")
</pallas_src>

<mosaic_0001>
module attributes {stable_mosaic.version = 11 : i64} {
  func.func @topic_aggregation_kernel(%arg0: i32, %arg1: memref<2x8x64xf32, #tpu.memory_space<vmem>>, %arg2: memref<2x8x64xf32, #tpu.memory_space<vmem>>, %arg3: memref<2x8x1xf32, #tpu.memory_space<vmem>>, %arg4: memref<2x8x64xf32, #tpu.memory_space<vmem>>, %arg5: memref<2x8x64xf32, #tpu.memory_space<vmem>>, %arg6: memref<2x1x8xf32, #tpu.memory_space<vmem>>, %arg7: memref<64x64xf32, #tpu.memory_space<vmem>>, %arg8: memref<1x64xf32, #tpu.memory_space<vmem>>, %arg9: memref<64x64xf32, #tpu.memory_space<vmem>>, %arg10: memref<1x64xf32, #tpu.memory_space<vmem>>, %arg11: memref<128x128xf32, #tpu.memory_space<vmem>>, %arg12: memref<1x128xf32, #tpu.memory_space<vmem>>, %arg13: memref<2x8x128xf32, #tpu.memory_space<vmem>>) attributes {dimension_semantics = [#tpu.dimension_semantics<parallel>], iteration_bounds = array<i64: 1>, scalar_prefetch = 0 : i64, scratch_operands = 0 : i64, tpu.core_type = #tpu.core_type<tc>, window_params = [{transform_indices = @transform_0, window_bounds = array<i64: 2, 8, 64>}, {transform_indices = @transform_1, window_bounds = array<i64: 2, 8, 64>}, {transform_indices = @transform_2, window_bounds = array<i64: 2, 8, 1>}, {transform_indices = @transform_3, window_bounds = array<i64: 2, 8, 64>}, {transform_indices = @transform_4, window_bounds = array<i64: 2, 8, 64>}, {transform_indices = @transform_5, window_bounds = array<i64: 2, 1, 8>}, {pipeline_mode = #tpu.pipeline_mode<synchronous>, transform_indices = @transform_6, window_bounds = array<i64: 64, 64>}, {pipeline_mode = #tpu.pipeline_mode<synchronous>, transform_indices = @transform_7, window_bounds = array<i64: 1, 64>}, {pipeline_mode = #tpu.pipeline_mode<synchronous>, transform_indices = @transform_8, window_bounds = array<i64: 64, 64>}, {pipeline_mode = #tpu.pipeline_mode<synchronous>, transform_indices = @transform_9, window_bounds = array<i64: 1, 64>}, {pipeline_mode = #tpu.pipeline_mode<synchronous>, transform_indices = @transform_10, window_bounds = array<i64: 128, 128>}, {pipeline_mode = #tpu.pipeline_mode<synchronous>, transform_indices = @transform_11, window_bounds = array<i64: 1, 128>}, {transform_indices = @transform_12, window_bounds = array<i64: 2, 8, 128>}]} {
    %c0 = arith.constant 0 : index
    %c0_0 = arith.constant 0 : index
    %c0_1 = arith.constant 0 : index
    %0 = vector.load %arg2[%c0, %c0_0, %c0_1] : memref<2x8x64xf32, #tpu.memory_space<vmem>>, vector<2x8x64xf32>
    %1 = vector.shape_cast %0 : vector<2x8x64xf32> to vector<16x64xf32>
    %c0_2 = arith.constant 0 : index
    %c0_3 = arith.constant 0 : index
    %2 = vector.load %arg7[%c0_2, %c0_3] : memref<64x64xf32, #tpu.memory_space<vmem>>, vector<64x64xf32>
    %cst = arith.constant dense<0.000000e+00> : vector<16x64xf32>
    %3 = tpu.matmul %1, %2, %cst {dimension_numbers = #tpu.dot_dimension_numbers<[1], [0], [0], [1], [0, 0, 1, 1], [], []>} : vector<16x64xf32>, vector<64x64xf32>, vector<16x64xf32> -> vector<16x64xf32>
    %c0_4 = arith.constant 0 : index
    %c0_5 = arith.constant 0 : index
    %4 = vector.load %arg8[%c0_4, %c0_5] : memref<1x64xf32, #tpu.memory_space<vmem>>, vector<1x64xf32>
    %5 = vector.broadcast %4 : vector<1x64xf32> to vector<16x64xf32>
    %6 = arith.addf %3, %5 : vector<16x64xf32>
    %7 = vector.extract_strided_slice %6 {offsets = [0, 0], sizes = [16, 32], strides = [1, 1]} : vector<16x64xf32> to vector<16x32xf32>
    %8 = math.tanh %7 : vector<16x32xf32>
    %9 = vector.extract_strided_slice %6 {offsets = [0, 32], sizes = [16, 32], strides = [1, 1]} : vector<16x64xf32> to vector<16x32xf32>
    %cst_6 = arith.constant 0.000000e+00 : f32
    %10 = vector.broadcast %cst_6 : f32 to vector<16x32xf32>
    %11 = arith.cmpf oge, %9, %10 : vector<16x32xf32>
    %cst_7 = arith.constant 0.00999999977 : f32
    %12 = vector.broadcast %cst_7 : f32 to vector<16x32xf32>
    %13 = arith.mulf %12, %9 : vector<16x32xf32>
    %14 = arith.select %11, %9, %13 : vector<16x32xi1>, vector<16x32xf32>
    %15 = arith.mulf %8, %14 : vector<16x32xf32>
    %16 = vector.shape_cast %15 : vector<16x32xf32> to vector<2x8x32xf32>
    %c0_8 = arith.constant 0 : index
    %c0_9 = arith.constant 0 : index
    %c0_10 = arith.constant 0 : index
    %17 = vector.load %arg5[%c0_8, %c0_9, %c0_10] : memref<2x8x64xf32, #tpu.memory_space<vmem>>, vector<2x8x64xf32>
    %18 = vector.shape_cast %17 : vector<2x8x64xf32> to vector<16x64xf32>
    %c0_11 = arith.constant 0 : index
    %c0_12 = arith.constant 0 : index
    %19 = vector.load %arg9[%c0_11, %c0_12] : memref<64x64xf32, #tpu.memory_space<vmem>>, vector<64x64xf32>
    %cst_13 = arith.constant dense<0.000000e+00> : vector<16x64xf32>
    %20 = tpu.matmul %18, %19, %cst_13 {dimension_numbers = #tpu.dot_dimension_numbers<[1], [0], [0], [1], [0, 0, 1, 1], [], []>} : vector<16x64xf32>, vector<64x64xf32>, vector<16x64xf32> -> vector<16x64xf32>
    %c0_14 = arith.constant 0 : index
    %c0_15 = arith.constant 0 : index
    %21 = vector.load %arg10[%c0_14, %c0_15] : memref<1x64xf32, #tpu.memory_space<vmem>>, vector<1x64xf32>
    %22 = vector.broadcast %21 : vector<1x64xf32> to vector<16x64xf32>
    %23 = arith.addf %20, %22 : vector<16x64xf32>
    %24 = vector.extract_strided_slice %23 {offsets = [0, 0], sizes = [16, 32], strides = [1, 1]} : vector<16x64xf32> to vector<16x32xf32>
    %25 = math.tanh %24 : vector<16x32xf32>
    %26 = vector.extract_strided_slice %23 {offsets = [0, 32], sizes = [16, 32], strides = [1, 1]} : vector<16x64xf32> to vector<16x32xf32>
    %cst_16 = arith.constant 0.000000e+00 : f32
    %27 = vector.broadcast %cst_16 : f32 to vector<16x32xf32>
    %28 = arith.cmpf oge, %26, %27 : vector<16x32xf32>
    %cst_17 = arith.constant 0.00999999977 : f32
    %29 = vector.broadcast %cst_17 : f32 to vector<16x32xf32>
    %30 = arith.mulf %29, %26 : vector<16x32xf32>
    %31 = arith.select %28, %26, %30 : vector<16x32xi1>, vector<16x32xf32>
    %32 = arith.mulf %25, %31 : vector<16x32xf32>
    %33 = vector.shape_cast %32 : vector<16x32xf32> to vector<2x8x32xf32>
    %c0_18 = arith.constant 0 : index
    %c0_19 = arith.constant 0 : index
    %c0_20 = arith.constant 0 : index
    %34 = vector.load %arg6[%c0_18, %c0_19, %c0_20] : memref<2x1x8xf32, #tpu.memory_space<vmem>>, vector<2x1x8xf32>
    "tpu.trace_start"() <{level = 10 : i32, message = "bqh,bkh->bqk"}> : () -> ()
    %cst_21 = arith.constant dense<0.000000e+00> : vector<2x8x8xf32>
    %35 = tpu.matmul %16, %33, %cst_21 {dimension_numbers = #tpu.dot_dimension_numbers<[2], [2], [1], [1], [0, 0, 0, 1, 1, 1], [0], [0]>} : vector<2x8x32xf32>, vector<2x8x32xf32>, vector<2x8x8xf32> -> vector<2x8x8xf32>
    "tpu.trace_stop"() : () -> ()
    %36 = vector.broadcast %34 : vector<2x1x8xf32> to vector<2x8x8xf32>
    %37 = arith.mulf %35, %36 : vector<2x8x8xf32>
    %cst_22 = arith.constant 1.000000e+00 : f32
    %38 = vector.broadcast %cst_22 : f32 to vector<2x1x8xf32>
    %39 = arith.subf %34, %38 : vector<2x1x8xf32>
    %cst_23 = arith.constant 9.99999982E+12 : f32
    %40 = vector.broadcast %cst_23 : f32 to vector<2x1x8xf32>
    %41 = arith.mulf %39, %40 : vector<2x1x8xf32>
    %42 = vector.broadcast %41 : vector<2x1x8xf32> to vector<2x8x8xf32>
    %43 = arith.addf %37, %42 : vector<2x8x8xf32>
    %cst_24 = arith.constant dense<0xFF800000> : vector<2x8xf32>
    %44 = vector.multi_reduction <maximumf>, %43, %cst_24 [2] : vector<2x8x8xf32> to vector<2x8xf32>
    %45 = vector.shape_cast %44 : vector<2x8xf32> to vector<2x8x1xf32>
    %46 = vector.broadcast %45 : vector<2x8x1xf32> to vector<2x8x8xf32>
    %47 = arith.subf %43, %46 : vector<2x8x8xf32>
    %48 = math.exp %47 : vector<2x8x8xf32>
    %cst_25 = arith.constant dense<0.000000e+00> : vector<2x8xf32>
    %49 = vector.multi_reduction <add>, %48, %cst_25 [2] : vector<2x8x8xf32> to vector<2x8xf32>
    %50 = vector.shape_cast %49 : vector<2x8xf32> to vector<2x8x1xf32>
    %51 = tpu.reciprocal %50 : vector<2x8x1xf32> -> vector<2x8x1xf32>
    %52 = vector.broadcast %51 : vector<2x8x1xf32> to vector<2x8x8xf32>
    %53 = arith.mulf %48, %52 : vector<2x8x8xf32>
    %c0_26 = arith.constant 0 : index
    %c0_27 = arith.constant 0 : index
    %c0_28 = arith.constant 0 : index
    %54 = vector.load %arg3[%c0_26, %c0_27, %c0_28] : memref<2x8x1xf32, #tpu.memory_space<vmem>>, vector<2x8x1xf32>
    %c0_29 = arith.constant 0 : index
    %c0_30 = arith.constant 0 : index
    %c0_31 = arith.constant 0 : index
    %55 = vector.load %arg4[%c0_29, %c0_30, %c0_31] : memref<2x8x64xf32, #tpu.memory_space<vmem>>, vector<2x8x64xf32>
    "tpu.trace_start"() <{level = 10 : i32, message = "bqk,bke->bqe"}> : () -> ()
    %cst_32 = arith.constant dense<0.000000e+00> : vector<2x8x64xf32>
    %56 = tpu.matmul %53, %55, %cst_32 {dimension_numbers = #tpu.dot_dimension_numbers<[2], [1], [1], [2], [0, 0, 0, 1, 1, 2], [0], [0]>} : vector<2x8x8xf32>, vector<2x8x64xf32>, vector<2x8x64xf32> -> vector<2x8x64xf32>
    "tpu.trace_stop"() : () -> ()
    %57 = vector.broadcast %54 : vector<2x8x1xf32> to vector<2x8x64xf32>
    %58 = arith.mulf %56, %57 : vector<2x8x64xf32>
    %59 = vector.shape_cast %58 : vector<2x8x64xf32> to vector<16x64xf32>
    %c0_33 = arith.constant 0 : index
    %c0_34 = arith.constant 0 : index
    %c0_35 = arith.constant 0 : index
    %60 = vector.load %arg1[%c0_33, %c0_34, %c0_35] : memref<2x8x64xf32, #tpu.memory_space<vmem>>, vector<2x8x64xf32>
    %61 = vector.shape_cast %60 : vector<2x8x64xf32> to vector<16x64xf32>
    %62 = tpu.concatenate %59, %61 in 1 : vector<16x64xf32>, vector<16x64xf32> -> vector<16x128xf32>
    %c0_36 = arith.constant 0 : index
    %c0_37 = arith.constant 0 : index
    %63 = vector.load %arg11[%c0_36, %c0_37] : memref<128x128xf32, #tpu.memory_space<vmem>>, vector<128x128xf32>
    %cst_38 = arith.constant dense<0.000000e+00> : vector<16x128xf32>
    %64 = tpu.matmul %62, %63, %cst_38 {dimension_numbers = #tpu.dot_dimension_numbers<[1], [0], [0], [1], [0, 0, 1, 1], [], []>} : vector<16x128xf32>, vector<128x128xf32>, vector<16x128xf32> -> vector<16x128xf32>
    %c0_39 = arith.constant 0 : index
    %c0_40 = arith.constant 0 : index
    %65 = vector.load %arg12[%c0_39, %c0_40] : memref<1x128xf32, #tpu.memory_space<vmem>>, vector<1x128xf32>
    %66 = vector.broadcast %65 : vector<1x128xf32> to vector<16x128xf32>
    %67 = arith.addf %64, %66 : vector<16x128xf32>
    %68 = arith.negf %67 : vector<16x128xf32>
    %69 = math.exp %68 : vector<16x128xf32>
    %cst_41 = arith.constant 1.000000e+00 : f32
    %70 = vector.broadcast %cst_41 : f32 to vector<16x128xf32>
    %71 = arith.addf %70, %69 : vector<16x128xf32>
    %72 = arith.divf %70, %71 : vector<16x128xf32>
    %73 = arith.mulf %72, %62 : vector<16x128xf32>
    %74 = vector.shape_cast %73 : vector<16x128xf32> to vector<2x8x128xf32>
    %c0_42 = arith.constant 0 : index
    %c0_43 = arith.constant 0 : index
    %c0_44 = arith.constant 0 : index
    %75 = vector.load %arg13[%c0_42, %c0_43, %c0_44] : memref<2x8x128xf32, #tpu.memory_space<vmem>>, vector<2x8x128xf32>
    tpu.vector_store %arg13[%c0_42, %c0_43, %c0_44], %74 {strides = array<i32>} : memref<2x8x128xf32, #tpu.memory_space<vmem>>, vector<2x8x128xf32>,
    return
  }
  func.func @transform_0(%arg0: i32) -> (i32, i32, i32) {
    %c0_i32 = arith.constant 0 : i32
    %c0_i32_0 = arith.constant 0 : i32
    %c0_i32_1 = arith.constant 0 : i32
    return %arg0, %c0_i32, %c0_i32_0 : i32, i32, i32
  }
  func.func @transform_1(%arg0: i32) -> (i32, i32, i32) {
    %c0_i32 = arith.constant 0 : i32
    %c0_i32_0 = arith.constant 0 : i32
    %c0_i32_1 = arith.constant 0 : i32
    return %arg0, %c0_i32, %c0_i32_0 : i32, i32, i32
  }
  func.func @transform_2(%arg0: i32) -> (i32, i32, i32) {
    %c0_i32 = arith.constant 0 : i32
    %c0_i32_0 = arith.constant 0 : i32
    %c0_i32_1 = arith.constant 0 : i32
    return %arg0, %c0_i32, %c0_i32_0 : i32, i32, i32
  }
  func.func @transform_3(%arg0: i32) -> (i32, i32, i32) {
    %c0_i32 = arith.constant 0 : i32
    %c0_i32_0 = arith.constant 0 : i32
    %c0_i32_1 = arith.constant 0 : i32
    return %arg0, %c0_i32, %c0_i32_0 : i32, i32, i32
  }
  func.func @transform_4(%arg0: i32) -> (i32, i32, i32) {
    %c0_i32 = arith.constant 0 : i32
    %c0_i32_0 = arith.constant 0 : i32
    %c0_i32_1 = arith.constant 0 : i32
    return %arg0, %c0_i32, %c0_i32_0 : i32, i32, i32
  }
  func.func @transform_5(%arg0: i32) -> (i32, i32, i32) {
    %c0_i32 = arith.constant 0 : i32
    %c0_i32_0 = arith.constant 0 : i32
    %c0_i32_1 = arith.constant 0 : i32
    return %arg0, %c0_i32, %c0_i32_0 : i32, i32, i32
  }
  func.func @transform_6(%arg0: i32) -> (i32, i32) {
    %c0_i32 = arith.constant 0 : i32
    %c0_i32_0 = arith.constant 0 : i32
    %c0_i32_1 = arith.constant 0 : i32
    return %c0_i32, %c0_i32_0 : i32, i32
  }
  func.func @transform_7(%arg0: i32) -> (i32, i32) {
    %c0_i32 = arith.constant 0 : i32
    %c0_i32_0 = arith.constant 0 : i32
    %c0_i32_1 = arith.constant 0 : i32
    return %c0_i32, %c0_i32_0 : i32, i32
  }
  func.func @transform_8(%arg0: i32) -> (i32, i32) {
    %c0_i32 = arith.constant 0 : i32
    %c0_i32_0 = arith.constant 0 : i32
    %c0_i32_1 = arith.constant 0 : i32
    return %c0_i32, %c0_i32_0 : i32, i32
  }
  func.func @transform_9(%arg0: i32) -> (i32, i32) {
    %c0_i32 = arith.constant 0 : i32
    %c0_i32_0 = arith.constant 0 : i32
    %c0_i32_1 = arith.constant 0 : i32
    return %c0_i32, %c0_i32_0 : i32, i32
  }
  func.func @transform_10(%arg0: i32) -> (i32, i32) {
    %c0_i32 = arith.constant 0 : i32
    %c0_i32_0 = arith.constant 0 : i32
    %c0_i32_1 = arith.constant 0 : i32
    return %c0_i32, %c0_i32_0 : i32, i32
  }
  func.func @transform_11(%arg0: i32) -> (i32, i32) {
    %c0_i32 = arith.constant 0 : i32
    %c0_i32_0 = arith.constant 0 : i32
    %c0_i32_1 = arith.constant 0 : i32
    return %c0_i32, %c0_i32_0 : i32, i32
  }
  func.func @transform_12(%arg0: i32) -> (i32, i32, i32) {
    %c0_i32 = arith.constant 0 : i32
    %c0_i32_0 = arith.constant 0 : i32
    %c0_i32_1 = arith.constant 0 : i32
    return %arg0, %c0_i32, %c0_i32_0 : i32, i32, i32
  }
}

module attributes {stable_mosaic.version = 11 : i64} {
  func.func @topic_aggregation_kernel(%arg0: i32, %arg1: memref<2x8x64xf32, #tpu.memory_space<vmem>>, %arg2: memref<2x8x64xf32, #tpu.memory_space<vmem>>, %arg3: memref<2x8x1xf32, #tpu.memory_space<vmem>>, %arg4: memref<2x8x64xf32, #tpu.memory_space<vmem>>, %arg5: memref<2x8x64xf32, #tpu.memory_space<vmem>>, %arg6: memref<2x1x8xf32, #tpu.memory_space<vmem>>, %arg7: memref<64x64xf32, #tpu.memory_space<vmem>>, %arg8: memref<1x64xf32, #tpu.memory_space<vmem>>, %arg9: memref<64x64xf32, #tpu.memory_space<vmem>>, %arg10: memref<1x64xf32, #tpu.memory_space<vmem>>, %arg11: memref<128x128xf32, #tpu.memory_space<vmem>>, %arg12: memref<1x128xf32, #tpu.memory_space<vmem>>, %arg13: memref<2x8x128xf32, #tpu.memory_space<vmem>>) attributes {dimension_semantics = [#tpu.dimension_semantics<parallel>], iteration_bounds = array<i64: 1>, scalar_prefetch = 0 : i64, scratch_operands = 0 : i64, tpu.core_type = #tpu.core_type<tc>, window_params = [{transform_indices = @transform_0, window_bounds = array<i64: 2, 8, 64>}, {transform_indices = @transform_1, window_bounds = array<i64: 2, 8, 64>}, {transform_indices = @transform_2, window_bounds = array<i64: 2, 8, 1>}, {transform_indices = @transform_3, window_bounds = array<i64: 2, 8, 64>}, {transform_indices = @transform_4, window_bounds = array<i64: 2, 8, 64>}, {transform_indices = @transform_5, window_bounds = array<i64: 2, 1, 8>}, {pipeline_mode = #tpu.pipeline_mode<synchronous>, transform_indices = @transform_6, window_bounds = array<i64: 64, 64>}, {pipeline_mode = #tpu.pipeline_mode<synchronous>, transform_indices = @transform_7, window_bounds = array<i64: 1, 64>}, {pipeline_mode = #tpu.pipeline_mode<synchronous>, transform_indices = @transform_8, window_bounds = array<i64: 64, 64>}, {pipeline_mode = #tpu.pipeline_mode<synchronous>, transform_indices = @transform_9, window_bounds = array<i64: 1, 64>}, {pipeline_mode = #tpu.pipeline_mode<synchronous>, transform_indices = @transform_10, window_bounds = array<i64: 128, 128>}, {pipeline_mode = #tpu.pipeline_mode<synchronous>, transform_indices = @transform_11, window_bounds = array<i64: 1, 128>}, {transform_indices = @transform_12, window_bounds = array<i64: 2, 8, 128>}]} {
    %c0 = arith.constant 0 : index
    %c0_0 = arith.constant 0 : index
    %c0_1 = arith.constant 0 : index
    %0 = vector.load %arg2[%c0, %c0_0, %c0_1] : memref<2x8x64xf32, #tpu.memory_space<vmem>>, vector<2x8x64xf32>
    %1 = vector.shape_cast %0 : vector<2x8x64xf32> to vector<16x64xf32>
    %c0_2 = arith.constant 0 : index
    %c0_3 = arith.constant 0 : index
    %2 = vector.load %arg7[%c0_2, %c0_3] : memref<64x64xf32, #tpu.memory_space<vmem>>, vector<64x64xf32>
    %cst = arith.constant dense<0.000000e+00> : vector<16x64xf32>
    %3 = tpu.matmul %1, %2, %cst {dimension_numbers = #tpu.dot_dimension_numbers<[1], [0], [0], [1], [0, 0, 1, 1], [], []>} : vector<16x64xf32>, vector<64x64xf32>, vector<16x64xf32> -> vector<16x64xf32>
    %c0_4 = arith.constant 0 : index
    %c0_5 = arith.constant 0 : index
    %4 = vector.load %arg8[%c0_4, %c0_5] : memref<1x64xf32, #tpu.memory_space<vmem>>, vector<1x64xf32>
    %5 = vector.broadcast %4 : vector<1x64xf32> to vector<16x64xf32>
    %6 = arith.addf %3, %5 : vector<16x64xf32>
    %7 = vector.extract_strided_slice %6 {offsets = [0, 0], sizes = [16, 32], strides = [1, 1]} : vector<16x64xf32> to vector<16x32xf32>
    %8 = math.tanh %7 : vector<16x32xf32>
    %9 = vector.extract_strided_slice %6 {offsets = [0, 32], sizes = [16, 32], strides = [1, 1]} : vector<16x64xf32> to vector<16x32xf32>
    %cst_6 = arith.constant 0.000000e+00 : f32
    %10 = vector.broadcast %cst_6 : f32 to vector<16x32xf32>
    %11 = arith.cmpf oge, %9, %10 : vector<16x32xf32>
    %cst_7 = arith.constant 0.00999999977 : f32
    %12 = vector.broadcast %cst_7 : f32 to vector<16x32xf32>
    %13 = arith.mulf %12, %9 : vector<16x32xf32>
    %14 = arith.select %11, %9, %13 : vector<16x32xi1>, vector<16x32xf32>
    %15 = arith.mulf %8, %14 : vector<16x32xf32>
    %16 = vector.shape_cast %15 : vector<16x32xf32> to vector<2x8x32xf32>
    %c0_8 = arith.constant 0 : index
    %c0_9 = arith.constant 0 : index
    %c0_10 = arith.constant 0 : index
    %17 = vector.load %arg5[%c0_8, %c0_9, %c0_10] : memref<2x8x64xf32, #tpu.memory_space<vmem>>, vector<2x8x64xf32>
    %18 = vector.shape_cast %17 : vector<2x8x64xf32> to vector<16x64xf32>
    %c0_11 = arith.constant 0 : index
    %c0_12 = arith.constant 0 : index
    %19 = vector.load %arg9[%c0_11, %c0_12] : memref<64x64xf32, #tpu.memory_space<vmem>>, vector<64x64xf32>
    %cst_13 = arith.constant dense<0.000000e+00> : vector<16x64xf32>
    %20 = tpu.matmul %18, %19, %cst_13 {dimension_numbers = #tpu.dot_dimension_numbers<[1], [0], [0], [1], [0, 0, 1, 1], [], []>} : vector<16x64xf32>, vector<64x64xf32>, vector<16x64xf32> -> vector<16x64xf32>
    %c0_14 = arith.constant 0 : index
    %c0_15 = arith.constant 0 : index
    %21 = vector.load %arg10[%c0_14, %c0_15] : memref<1x64xf32, #tpu.memory_space<vmem>>, vector<1x64xf32>
    %22 = vector.broadcast %21 : vector<1x64xf32> to vector<16x64xf32>
    %23 = arith.addf %20, %22 : vector<16x64xf32>
    %24 = vector.extract_strided_slice %23 {offsets = [0, 0], sizes = [16, 32], strides = [1, 1]} : vector<16x64xf32> to vector<16x32xf32>
    %25 = math.tanh %24 : vector<16x32xf32>
    %26 = vector.extract_strided_slice %23 {offsets = [0, 32], sizes = [16, 32], strides = [1, 1]} : vector<16x64xf32> to vector<16x32xf32>
    %cst_16 = arith.constant 0.000000e+00 : f32
    %27 = vector.broadcast %cst_16 : f32 to vector<16x32xf32>
    %28 = arith.cmpf oge, %26, %27 : vector<16x32xf32>
    %cst_17 = arith.constant 0.00999999977 : f32
    %29 = vector.broadcast %cst_17 : f32 to vector<16x32xf32>
    %30 = arith.mulf %29, %26 : vector<16x32xf32>
    %31 = arith.select %28, %26, %30 : vector<16x32xi1>, vector<16x32xf32>
    %32 = arith.mulf %25, %31 : vector<16x32xf32>
    %33 = vector.shape_cast %32 : vector<16x32xf32> to vector<2x8x32xf32>
    %c0_18 = arith.constant 0 : index
    %c0_19 = arith.constant 0 : index
    %c0_20 = arith.constant 0 : index
    %34 = vector.load %arg6[%c0_18, %c0_19, %c0_20] : memref<2x1x8xf32, #tpu.memory_space<vmem>>, vector<2x1x8xf32>
    "tpu.trace_start"() <{level = 10 : i32, message = "bqh,bkh->bqk"}> : () -> ()
    %cst_21 = arith.constant dense<0.000000e+00> : vector<2x8x8xf32>
    %35 = tpu.matmul %16, %33, %cst_21 {dimension_numbers = #tpu.dot_dimension_numbers<[2], [2], [1], [1], [0, 0, 0, 1, 1, 1], [0], [0]>} : vector<2x8x32xf32>, vector<2x8x32xf32>, vector<2x8x8xf32> -> vector<2x8x8xf32>
    "tpu.trace_stop"() : () -> ()
    %36 = vector.broadcast %34 : vector<2x1x8xf32> to vector<2x8x8xf32>
    %37 = arith.mulf %35, %36 : vector<2x8x8xf32>
    %cst_22 = arith.constant 1.000000e+00 : f32
    %38 = vector.broadcast %cst_22 : f32 to vector<2x1x8xf32>
    %39 = arith.subf %34, %38 : vector<2x1x8xf32>
    %cst_23 = arith.constant 9.99999982E+12 : f32
    %40 = vector.broadcast %cst_23 : f32 to vector<2x1x8xf32>
    %41 = arith.mulf %39, %40 : vector<2x1x8xf32>
    %42 = vector.broadcast %41 : vector<2x1x8xf32> to vector<2x8x8xf32>
    %43 = arith.addf %37, %42 : vector<2x8x8xf32>
    %cst_24 = arith.constant dense<0xFF800000> : vector<2x8xf32>
    %44 = vector.multi_reduction <maximumf>, %43, %cst_24 [2] : vector<2x8x8xf32> to vector<2x8xf32>
    %45 = vector.shape_cast %44 : vector<2x8xf32> to vector<2x8x1xf32>
    %46 = vector.broadcast %45 : vector<2x8x1xf32> to vector<2x8x8xf32>
    %47 = arith.subf %43, %46 : vector<2x8x8xf32>
    %48 = math.exp %47 : vector<2x8x8xf32>
    %cst_25 = arith.constant dense<0.000000e+00> : vector<2x8xf32>
    %49 = vector.multi_reduction <add>, %48, %cst_25 [2] : vector<2x8x8xf32> to vector<2x8xf32>
    %50 = vector.shape_cast %49 : vector<2x8xf32> to vector<2x8x1xf32>
    %51 = tpu.reciprocal %50 : vector<2x8x1xf32> -> vector<2x8x1xf32>
    %52 = vector.broadcast %51 : vector<2x8x1xf32> to vector<2x8x8xf32>
    %53 = arith.mulf %48, %52 : vector<2x8x8xf32>
    %c0_26 = arith.constant 0 : index
    %c0_27 = arith.constant 0 : index
    %c0_28 = arith.constant 0 : index
    %54 = vector.load %arg3[%c0_26, %c0_27, %c0_28] : memref<2x8x1xf32, #tpu.memory_space<vmem>>, vector<2x8x1xf32>
    %c0_29 = arith.constant 0 : index
    %c0_30 = arith.constant 0 : index
    %c0_31 = arith.constant 0 : index
    %55 = vector.load %arg4[%c0_29, %c0_30, %c0_31] : memref<2x8x64xf32, #tpu.memory_space<vmem>>, vector<2x8x64xf32>
    "tpu.trace_start"() <{level = 10 : i32, message = "bqk,bke->bqe"}> : () -> ()
    %cst_32 = arith.constant dense<0.000000e+00> : vector<2x8x64xf32>
    %56 = tpu.matmul %53, %55, %cst_32 {dimension_numbers = #tpu.dot_dimension_numbers<[2], [1], [1], [2], [0, 0, 0, 1, 1, 2], [0], [0]>} : vector<2x8x8xf32>, vector<2x8x64xf32>, vector<2x8x64xf32> -> vector<2x8x64xf32>
    "tpu.trace_stop"() : () -> ()
    %57 = vector.broadcast %54 : vector<2x8x1xf32> to vector<2x8x64xf32>
    %58 = arith.mulf %56, %57 : vector<2x8x64xf32>
    %59 = vector.shape_cast %58 : vector<2x8x64xf32> to vector<16x64xf32>
    %c0_33 = arith.constant 0 : index
    %c0_34 = arith.constant 0 : index
    %c0_35 = arith.constant 0 : index
    %60 = vector.load %arg1[%c0_33, %c0_34, %c0_35] : memref<2x8x64xf32, #tpu.memory_space<vmem>>, vector<2x8x64xf32>
    %61 = vector.shape_cast %60 : vector<2x8x64xf32> to vector<16x64xf32>
    %62 = tpu.concatenate %59, %61 in 1 : vector<16x64xf32>, vector<16x64xf32> -> vector<16x128xf32>
    %c0_36 = arith.constant 0 : index
    %c0_37 = arith.constant 0 : index
    %63 = vector.load %arg11[%c0_36, %c0_37] : memref<128x128xf32, #tpu.memory_space<vmem>>, vector<128x128xf32>
    %cst_38 = arith.constant dense<0.000000e+00> : vector<16x128xf32>
    %64 = tpu.matmul %62, %63, %cst_38 {dimension_numbers = #tpu.dot_dimension_numbers<[1], [0], [0], [1], [0, 0, 1, 1], [], []>} : vector<16x128xf32>, vector<128x128xf32>, vector<16x128xf32> -> vector<16x128xf32>
    %c0_39 = arith.constant 0 : index
    %c0_40 = arith.constant 0 : index
    %65 = vector.load %arg12[%c0_39, %c0_40] : memref<1x128xf32, #tpu.memory_space<vmem>>, vector<1x128xf32>
    %66 = vector.broadcast %65 : vector<1x128xf32> to vector<16x128xf32>
    %67 = arith.addf %64, %66 : vector<16x128xf32>
    %68 = arith.negf %67 : vector<16x128xf32>
    %69 = math.exp %68 : vector<16x128xf32>
    %cst_41 = arith.constant 1.000000e+00 : f32
    %70 = vector.broadcast %cst_41 : f32 to vector<16x128xf32>
    %71 = arith.addf %70, %69 : vector<16x128xf32>
    %72 = arith.divf %70, %71 : vector<16x128xf32>
    %73 = arith.mulf %72, %62 : vector<16x128xf32>
    %74 = vector.shape_cast %73 : vector<16x128xf32> to vector<2x8x128xf32>
    %c0_42 = arith.constant 0 : index
    %c0_43 = arith.constant 0 : index
    %c0_44 = arith.constant 0 : index
    %75 = vector.load %arg13[%c0_42, %c0_43, %c0_44] : memref<2x8x128xf32, #tpu.memory_space<vmem>>, vector<2x8x128xf32>
    tpu.vector_store %arg13[%c0_42, %c0_43, %c0_44], %74 {strides = array<i32>} : memref<2x8x128xf32, #tpu.memory_space<vmem>>, vector<2x8x128xf32>,
    return
  }
  func.func @transform_0(%arg0: i32) -> (i32, i32, i32) {
    %c0_i32 = arith.constant 0 : i32
    %c0_i32_0 = arith.constant 0 : i32
    %c0_i32_1 = arith.constant 0 : i32
    return %arg0, %c0_i32, %c0_i32_0 : i32, i32, i32
  }
  func.func @transform_1(%arg0: i32) -> (i32, i32, i32) {
    %c0_i32 = arith.constant 0 : i32
    %c0_i32_0 = arith.constant 0 : i32
    %c0_i32_1 = arith.constant 0 : i32
    return %arg0, %c0_i32, %c0_i32_0 : i32, i32, i32
  }
  func.func @transform_2(%arg0: i32) -> (i32, i32, i32) {
    %c0_i32 = arith.constant 0 : i32
    %c0_i32_0 = arith.constant 0 : i32
    %c0_i32_1 = arith.constant 0 : i32
    return %arg0, %c0_i32, %c0_i32_0 : i32, i32, i32
  }
  func.func @transform_3(%arg0: i32) -> (i32, i32, i32) {
    %c0_i32 = arith.constant 0 : i32
    %c0_i32_0 = arith.constant 0 : i32
    %c0_i32_1 = arith.constant 0 : i32
    return %arg0, %c0_i32, %c0_i32_0 : i32, i32, i32
  }
  func.func @transform_4(%arg0: i32) -> (i32, i32, i32) {
    %c0_i32 = arith.constant 0 : i32
    %c0_i32_0 = arith.constant 0 : i32
    %c0_i32_1 = arith.constant 0 : i32
    return %arg0, %c0_i32, %c0_i32_0 : i32, i32, i32
  }
  func.func @transform_5(%arg0: i32) -> (i32, i32, i32) {
    %c0_i32 = arith.constant 0 : i32
    %c0_i32_0 = arith.constant 0 : i32
    %c0_i32_1 = arith.constant 0 : i32
    return %arg0, %c0_i32, %c0_i32_0 : i32, i32, i32
  }
  func.func @transform_6(%arg0: i32) -> (i32, i32) {
    %c0_i32 = arith.constant 0 : i32
    %c0_i32_0 = arith.constant 0 : i32
    %c0_i32_1 = arith.constant 0 : i32
    return %c0_i32, %c0_i32_0 : i32, i32
  }
  func.func @transform_7(%arg0: i32) -> (i32, i32) {
    %c0_i32 = arith.constant 0 : i32
    %c0_i32_0 = arith.constant 0 : i32
    %c0_i32_1 = arith.constant 0 : i32
    return %c0_i32, %c0_i32_0 : i32, i32
  }
  func.func @transform_8(%arg0: i32) -> (i32, i32) {
    %c0_i32 = arith.constant 0 : i32
    %c0_i32_0 = arith.constant 0 : i32
    %c0_i32_1 = arith.constant 0 : i32
    return %c0_i32, %c0_i32_0 : i32, i32
  }
  func.func @transform_9(%arg0: i32) -> (i32, i32) {
    %c0_i32 = arith.constant 0 : i32
    %c0_i32_0 = arith.constant 0 : i32
    %c0_i32_1 = arith.constant 0 : i32
    return %c0_i32, %c0_i32_0 : i32, i32
  }
  func.func @transform_10(%arg0: i32) -> (i32, i32) {
    %c0_i32 = arith.constant 0 : i32
    %c0_i32_0 = arith.constant 0 : i32
    %c0_i32_1 = arith.constant 0 : i32
    return %c0_i32, %c0_i32_0 : i32, i32
  }
  func.func @transform_11(%arg0: i32) -> (i32, i32) {
    %c0_i32 = arith.constant 0 : i32
    %c0_i32_0 = arith.constant 0 : i32
    %c0_i32_1 = arith.constant 0 : i32
    return %c0_i32, %c0_i32_0 : i32, i32
  }
  func.func @transform_12(%arg0: i32) -> (i32, i32, i32) {
    %c0_i32 = arith.constant 0 : i32
    %c0_i32_0 = arith.constant 0 : i32
    %c0_i32_1 = arith.constant 0 : i32
    return %arg0, %c0_i32, %c0_i32_0 : i32, i32, i32
  }
}

</mosaic_0001>

<llo_original>
// kernel: tpu_custom_call.1
$region0: #{tpu_custom_call.1}
  #allocation0 [shape = 'u32[]', space=smem, size = 0x4, offset = 0x4, fixed_abs, tag = 'smem constant byte address 0x4 - core index']
  #allocation1 [shape = 'u32[144,128]{1,0:T(1,128)}', space=vmem, size = 0x12000, scoped, tag = 'internal scratch']
  %s0 = inlined_call_operand.vmem [shape: f32[2,8,64], index: 0, kind: input, shape index: {}]
  %s1 = inlined_call_operand.hbm [shape: f32[2,8,64], index: 1, kind: input, shape index: {}]
  %s2 = inlined_call_operand.vmem [shape: f32[2,8,1], index: 2, kind: input, shape index: {}]
  %s3 = inlined_call_operand.hbm [shape: f32[2,8,64], index: 3, kind: input, shape index: {}]
  %s4 = inlined_call_operand.hbm [shape: f32[2,8,64], index: 4, kind: input, shape index: {}]
  %s5 = inlined_call_operand.vmem [shape: f32[2,1,8], index: 5, kind: input, shape index: {}]
  %s6 = inlined_call_operand.hbm [shape: f32[64,64], index: 6, kind: input, shape index: {}]
  %s7 = inlined_call_operand.vmem [shape: f32[1,64], index: 7, kind: input, shape index: {}]
  %s8 = inlined_call_operand.hbm [shape: f32[64,64], index: 8, kind: input, shape index: {}]
  %s9 = inlined_call_operand.vmem [shape: f32[1,64], index: 9, kind: input, shape index: {}]
  %s10 = inlined_call_operand.hbm [shape: f32[128,128], index: 10, kind: input, shape index: {}]
  %s11 = inlined_call_operand.vmem [shape: f32[1,128], index: 11, kind: input, shape index: {}]
  %s12 = inlined_call_operand.hbm [shape: f32[2,8,128], index: 12, kind: output, shape index: {}]
  %s13 = sld [smem:[#allocation0]]
  $region82: #{tpu_custom_call.1} parent=0
    _
  %s15 = ssub.s32 1, %s13
  %s16 = scalar_select 0, %s15, %s13
  $region1: #{tpu_custom_call.1} parent=0
    #allocation2 [shape = 'u8[8192]{0}', space=vmem, size = 0x2000, scoped, tag = 'input window, operand 1, single buffered']
    #allocation3 [shape = 's32[1]{0}', space=sflag, size = 0x4, scoped, tag = 'scoped memory for tpu_custom_call.1']
    #allocation4 [shape = 's32[1]{0}', space=sflag, size = 0x4, scoped, tag = 'scoped memory for tpu_custom_call.1']
    #allocation5 [shape = 'u8[8192]{0}', space=vmem, size = 0x2000, scoped, tag = 'input window, operand 3, single buffered']
    #allocation6 [shape = 's32[1]{0}', space=sflag, size = 0x4, scoped, tag = 'scoped memory for tpu_custom_call.1']
    #allocation7 [shape = 'u8[8192]{0}', space=vmem, size = 0x2000, scoped, tag = 'input window, operand 4, single buffered']
    #allocation8 [shape = 'u8[32768]{0}', space=vmem, size = 0x8000, scoped, tag = 'input window, operand 6, single buffered']
    #allocation9 [shape = 's32[1]{0}', space=sflag, size = 0x4, scoped, tag = 'scoped memory for tpu_custom_call.1']
    #allocation10 [shape = 'u8[32768]{0}', space=vmem, size = 0x8000, scoped, tag = 'input window, operand 8, single buffered']
    #allocation11 [shape = 'u8[65536]{0}', space=vmem, size = 0x10000, scoped, tag = 'input window, operand 10, single buffered']
    #allocation12 [shape = 's32[1]{0}', space=sflag, size = 0x4, scoped, tag = 'scoped memory for tpu_custom_call.1']
    #allocation13 [shape = 'u8[8192]{0}', space=vmem, size = 0x2000, scoped, tag = 'output window, operand 0, single buffered']
    %17 = vsyncpa [#allocation3], 0
    %18 = vsyncpa [#allocation6], 0
    %19 = vsyncpa [#allocation9], 0
    %20 = vsyncpa [#allocation12], 0
    %21 = vsyncpa [#allocation4], 0
    // Predicated region
    $region2: #{tpu_custom_call.1} parent=1 // pred_check
      _
    $region3: #{tpu_custom_call.1} parent=1 // pred_check_branch
      %23 = sbr.rel (0) target = $region5
    $region4: #{tpu_custom_call.1} parent=1 // pred_region
      _
    $region5: #{tpu_custom_call.1} parent=1 // pred_fallthru
      _
    // Predicated region
    $region6: #{tpu_custom_call.1} parent=1 // pred_check
      _
    $region7: #{tpu_custom_call.1} parent=1 // pred_check_branch
      %25 = sbr.rel (0) target = $region9
    $region8: #{tpu_custom_call.1} parent=1 // pred_region
      %s27 = ssub.s32 256, 256
      %28 = vsyncadd [#allocation3], %s27
      %s29 = sshll.u32 [#allocation2], 4
      %s30 = int_to_ptr.vmem [resolvable:$true] %s29
      %35 = dma.hbm_to_vmem [thread:$0]  %s1, 256, %s30, [#allocation3], 128, 128, 8
    $region9: #{tpu_custom_call.1} parent=1 // pred_fallthru
      _
    // Predicated region
    $region10: #{tpu_custom_call.1} parent=1 // pred_check
      _
    $region11: #{tpu_custom_call.1} parent=1 // pred_check_branch
      %37 = sbr.rel (0) target = $region13
    $region12: #{tpu_custom_call.1} parent=1 // pred_region
      _
    $region13: #{tpu_custom_call.1} parent=1 // pred_fallthru
      _
    // Predicated region
    $region14: #{tpu_custom_call.1} parent=1 // pred_check
      _
    $region15: #{tpu_custom_call.1} parent=1 // pred_check_branch
      %39 = sbr.rel (0) target = $region17
    $region16: #{tpu_custom_call.1} parent=1 // pred_region
      %s41 = ssub.s32 256, 256
      %42 = vsyncadd [#allocation6], %s41
      %s43 = sshll.u32 [#allocation5], 4
      %s44 = int_to_ptr.vmem [resolvable:$true] %s43
      %49 = dma.hbm_to_vmem [thread:$0]  %s3, 256, %s44, [#allocation6], 128, 128, 8
    $region17: #{tpu_custom_call.1} parent=1 // pred_fallthru
      _
    // Predicated region
    $region18: #{tpu_custom_call.1} parent=1 // pred_check
      _
    $region19: #{tpu_custom_call.1} parent=1 // pred_check_branch
      %51 = sbr.rel (0) target = $region21
    $region20: #{tpu_custom_call.1} parent=1 // pred_region
      %s53 = ssub.s32 256, 256
      %54 = vsyncadd [#allocation6], %s53
      %s55 = sshll.u32 [#allocation7], 4
      %s56 = int_to_ptr.vmem [resolvable:$true] %s55
      %61 = dma.hbm_to_vmem [thread:$0]  %s4, 256, %s56, [#allocation6], 128, 128, 8
    $region21: #{tpu_custom_call.1} parent=1 // pred_fallthru
      _
    // Predicated region
    $region22: #{tpu_custom_call.1} parent=1 // pred_check
      _
    $region23: #{tpu_custom_call.1} parent=1 // pred_check_branch
      %63 = sbr.rel (0) target = $region25
    $region24: #{tpu_custom_call.1} parent=1 // pred_region
      _
    $region25: #{tpu_custom_call.1} parent=1 // pred_fallthru
      _
    // Predicated region
    $region26: #{tpu_custom_call.1} parent=1 // pred_check
      _
    $region27: #{tpu_custom_call.1} parent=1 // pred_check_branch
      %65 = sbr.rel (0) target = $region29
    $region28: #{tpu_custom_call.1} parent=1 // pred_region
      %s67 = ssub.s32 1024, 1024
      %68 = vsyncadd [#allocation9], %s67
      %s69 = sshll.u32 [#allocation8], 4
      %s70 = int_to_ptr.vmem [resolvable:$true] %s69
      %75 = dma.hbm_to_vmem [thread:$0]  %s6, 1024, %s70, [#allocation9], 128, 128, 8
    $region29: #{tpu_custom_call.1} parent=1 // pred_fallthru
      _
    // Predicated region
    $region30: #{tpu_custom_call.1} parent=1 // pred_check
      _
    $region31: #{tpu_custom_call.1} parent=1 // pred_check_branch
      %77 = sbr.rel (0) target = $region33
    $region32: #{tpu_custom_call.1} parent=1 // pred_region
      _
    $region33: #{tpu_custom_call.1} parent=1 // pred_fallthru
      _
    // Predicated region
    $region34: #{tpu_custom_call.1} parent=1 // pred_check
      _
    $region35: #{tpu_custom_call.1} parent=1 // pred_check_branch
      %79 = sbr.rel (0) target = $region37
    $region36: #{tpu_custom_call.1} parent=1 // pred_region
      %s81 = ssub.s32 1024, 1024
      %82 = vsyncadd [#allocation9], %s81
      %s83 = sshll.u32 [#allocation10], 4
      %s84 = int_to_ptr.vmem [resolvable:$true] %s83
      %89 = dma.hbm_to_vmem [thread:$0]  %s8, 1024, %s84, [#allocation9], 128, 128, 8
    $region37: #{tpu_custom_call.1} parent=1 // pred_fallthru
      _
    // Predicated region
    $region38: #{tpu_custom_call.1} parent=1 // pred_check
      _
    $region39: #{tpu_custom_call.1} parent=1 // pred_check_branch
      %91 = sbr.rel (0) target = $region41
    $region40: #{tpu_custom_call.1} parent=1 // pred_region
      _
    $region41: #{tpu_custom_call.1} parent=1 // pred_fallthru
      _
    // Predicated region
    $region42: #{tpu_custom_call.1} parent=1 // pred_check
      _
    $region43: #{tpu_custom_call.1} parent=1 // pred_check_branch
      %93 = sbr.rel (0) target = $region45
    $region44: #{tpu_custom_call.1} parent=1 // pred_region
      %s95 = ssub.s32 2048, 2048
      %96 = vsyncadd [#allocation12], %s95
      %s97 = sshll.u32 [#allocation11], 4
      %s98 = int_to_ptr.vmem [resolvable:$true] %s97
      %103 = dma.hbm_to_vmem [thread:$0]  %s10, 2048, %s98, [#allocation12], 128, 128, 8
    $region45: #{tpu_custom_call.1} parent=1 // pred_fallthru
      _
    // Predicated region
    $region46: #{tpu_custom_call.1} parent=1 // pred_check
      _
    $region47: #{tpu_custom_call.1} parent=1 // pred_check_branch
      %105 = sbr.rel (0) target = $region49
    $region48: #{tpu_custom_call.1} parent=1 // pred_region
      _
    $region49: #{tpu_custom_call.1} parent=1 // pred_fallthru
      _
    // Predicated region
    $region50: #{tpu_custom_call.1} parent=1 // pred_check
      _
    $region51: #{tpu_custom_call.1} parent=1 // pred_check_branch
      %107 = sbr.rel (0) target = $region53
    $region52: #{tpu_custom_call.1} parent=1 // pred_region
      %108 = dma.done [#allocation3], 256
    $region53: #{tpu_custom_call.1} parent=1 // pred_fallthru
      _
    // Predicated region
    $region54: #{tpu_custom_call.1} parent=1 // pred_check
      _
    $region55: #{tpu_custom_call.1} parent=1 // pred_check_branch
      %110 = sbr.rel (0) target = $region57
    $region56: #{tpu_custom_call.1} parent=1 // pred_region
      %111 = dma.done [#allocation6], 256
    $region57: #{tpu_custom_call.1} parent=1 // pred_fallthru
      _
    // Predicated region
    $region58: #{tpu_custom_call.1} parent=1 // pred_check
      _
    $region59: #{tpu_custom_call.1} parent=1 // pred_check_branch
      %113 = sbr.rel (0) target = $region61
    $region60: #{tpu_custom_call.1} parent=1 // pred_region
      %114 = dma.done [#allocation6], 256
    $region61: #{tpu_custom_call.1} parent=1 // pred_fallthru
      _
    // Predicated region
    $region62: #{tpu_custom_call.1} parent=1 // pred_check
      _
    $region63: #{tpu_custom_call.1} parent=1 // pred_check_branch
      %116 = sbr.rel (0) target = $region65
    $region64: #{tpu_custom_call.1} parent=1 // pred_region
      %117 = dma.done [#allocation9], 1024
    $region65: #{tpu_custom_call.1} parent=1 // pred_fallthru
      _
    // Predicated region
    $region66: #{tpu_custom_call.1} parent=1 // pred_check
      _
    $region67: #{tpu_custom_call.1} parent=1 // pred_check_branch
      %119 = sbr.rel (0) target = $region69
    $region68: #{tpu_custom_call.1} parent=1 // pred_region
      %120 = dma.done [#allocation9], 1024
    $region69: #{tpu_custom_call.1} parent=1 // pred_fallthru
      _
    // Predicated region
    $region70: #{tpu_custom_call.1} parent=1 // pred_check
      _
    $region71: #{tpu_custom_call.1} parent=1 // pred_check_branch
      %122 = sbr.rel (0) target = $region73
    $region72: #{tpu_custom_call.1} parent=1 // pred_region
      %123 = dma.done [#allocation12], 2048
    $region73: #{tpu_custom_call.1} parent=1 // pred_fallthru
      _
    %v124 = vld [vmem:[#allocation2] sm:$0xff]
    %v125 = vld [vmem:[#allocation2 + $0x8] sm:$0xff]
    %v126 = vld [vmem:[#allocation8] sm:$0xff]
    %v127 = vld [vmem:[#allocation8 + $0x8] sm:$0xff]
    %v128 = vld [vmem:[#allocation8 + $0x10] sm:$0xff]
    %v129 = vld [vmem:[#allocation8 + $0x18] sm:$0xff]
    %v130 = vld [vmem:[#allocation8 + $0x20] sm:$0xff]
    %v131 = vld [vmem:[#allocation8 + $0x28] sm:$0xff]
    %v132 = vld [vmem:[#allocation8 + $0x30] sm:$0xff]
    %v133 = vld [vmem:[#allocation8 + $0x38] sm:$0xff]
    %v134 = vld [vmem:[%s7] sm:$0x1]
    %v136 = vlaneseq
    %v137 = vshrl.u32 %v136, 7
    %v138 = vsub.s32 0, %v137
    %v139 = vrot.slane %v134, %v138
    %vm141 = vcmask 523264
    %v143 = vsel %vm141, %v124, 0
    %v146 = vsel %vm141, %v125, 0
    %148 = vmatprep.subr.mxu0 0.0
    %149 = vmatpush1.msra.mxu0 0.0
    %150 = vmatprep.subr.mxu0 0.0
    %151 = vmatpush1.msra.mxu0 0.0
    %152 = vmatprep.subr.mxu0 0.0
    %153 = vmatpush1.msra.mxu0 0.0
    %154 = vmatprep.subr.mxu0 0.0
    %155 = vmatpush1.msra.mxu0 0.0
    %156 = vmatprep.subr.mxu0 0.0
    %157 = vmatpush1.msra.mxu0 0.0
    %158 = vmatprep.subr.mxu0 0.0
    %159 = vmatpush1.msra.mxu0 0.0
    %160 = vmatprep.subr.mxu0 0.0
    %161 = vmatpush1.msra.mxu0 0.0
    %162 = vmatprep.subr.mxu0 0.0
    %163 = vmatpush1.msra.mxu0 0.0
    %164 = vmatprep.subr.mxu0 0.0
    %165 = vmatpush1.msra.mxu0 %v133
    %166 = vmatprep.subr.mxu0 0.0
    %167 = vmatpush1.msra.mxu0 %v132
    %168 = vmatprep.subr.mxu0 0.0
    %169 = vmatpush1.msra.mxu0 %v131
    %170 = vmatprep.subr.mxu0 0.0
    %171 = vmatpush1.msra.mxu0 %v130
    %172 = vmatprep.subr.mxu0 0.0
    %173 = vmatpush1.msra.mxu0 %v129
    %174 = vmatprep.subr.mxu0 0.0
    %175 = vmatpush1.msra.mxu0 %v128
    %176 = vmatprep.subr.mxu0 0.0
    %177 = vmatpush1.msra.mxu0 %v127
    %178 = vmatprep.subr.mxu0 0.0
    %179 = vmatpush1.msra.mxu0 %v126
    %180 = vmatprep.subr.mxu0 0.0
    %181 = vmatpush2.msra.mxu0 0.0
    %182 = vmatprep.subr.mxu0 0.0
    %183 = vmatpush2.msra.mxu0 0.0
    %184 = vmatprep.subr.mxu0 0.0
    %185 = vmatpush2.msra.mxu0 0.0
    %186 = vmatprep.subr.mxu0 0.0
    %187 = vmatpush2.msra.mxu0 0.0
    %188 = vmatprep.subr.mxu0 0.0
    %189 = vmatpush2.msra.mxu0 0.0
    %190 = vmatprep.subr.mxu0 0.0
    %191 = vmatpush2.msra.mxu0 0.0
    %192 = vmatprep.subr.mxu0 0.0
    %193 = vmatpush2.msra.mxu0 0.0
    %194 = vmatprep.subr.mxu0 0.0
    %195 = vmatpush2.msra.mxu0 0.0
    %196 = vmatprep.subr.mxu0 0.0
    %197 = vmatpush2.msra.mxu0 0.0
    %198 = vmatprep.subr.mxu0 0.0
    %199 = vmatpush2.msra.mxu0 0.0
    %200 = vmatprep.subr.mxu0 0.0
    %201 = vmatpush2.msra.mxu0 0.0
    %202 = vmatprep.subr.mxu0 0.0
    %203 = vmatpush2.msra.mxu0 0.0
    %204 = vmatprep.subr.mxu0 0.0
    %205 = vmatpush2.msra.mxu0 0.0
    %206 = vmatprep.subr.mxu0 0.0
    %207 = vmatpush2.msra.mxu0 0.0
    %208 = vmatprep.subr.mxu0 0.0
    %209 = vmatpush2.msra.mxu0 0.0
    %210 = vmatprep.subr.mxu0 0.0
    %211 = vmatpush2.msra.mxu0 0.0
    %212 = vmatprep.mubr.f32.mxu0 0.0
    %213 = vmatmul.mubr.f32.gmra.mxu0 %v143
    %v214 = vpop.f32.mrf.mxu0
    %v215 = vadd.f32 %v139, %v214
    %v216 = vpop.f32.mrf.mxu0
    %217 = vmatprep.mubr.f32.mxu0 0.0
    %218 = vmatmul.mubr.f32.gmra.mxu0 %v146
    %v219 = vpop.f32.mrf.mxu0
    %v220 = vadd.f32 %v139, %v219
    %v221 = vpop.f32.mrf.mxu0
    %222 = vdwg.mxu0
    %v223 = vtanh.pop %v215
    %v224 = vtanh.pop %v220
    %vm225 = vcmp.ge.f32.partialorder %v215, 0.0
    %vm226 = vcmp.ge.f32.partialorder %v220, 0.0
    %v227 = vmul.f32 %v215, 0.01
    %v228 = vmul.f32 %v220, 0.01
    %v229 = vsel %vm225, %v215, %v227
    %v230 = vsel %vm226, %v220, %v228
    %233 = vrot.lane.b32.xlu0 %v229, 96
    %v234 = vpop.permute.xlu0 %233
    %235 = vrot.lane.b32.xlu0 %v230, 96
    %v236 = vpop.permute.xlu0 %235
    %v239 = vmul.f32 %v223, %v234
    %v240 = vmul.f32 %v224, %v236
    %v241 = vld [vmem:[#allocation7] sm:$0xff]
    %v242 = vld [vmem:[#allocation7 + $0x8] sm:$0xff]
    %v243 = vld [vmem:[#allocation10] sm:$0xff]
    %v244 = vld [vmem:[#allocation10 + $0x8] sm:$0xff]
    %v245 = vld [vmem:[#allocation10 + $0x10] sm:$0xff]
    %v246 = vld [vmem:[#allocation10 + $0x18] sm:$0xff]
    %v247 = vld [vmem:[#allocation10 + $0x20] sm:$0xff]
    %v248 = vld [vmem:[#allocation10 + $0x28] sm:$0xff]
    %v249 = vld [vmem:[#allocation10 + $0x30] sm:$0xff]
    %v250 = vld [vmem:[#allocation10 + $0x38] sm:$0xff]
    %v251 = vld [vmem:[%s9] sm:$0x1]
    %v253 = vlaneseq
    %v254 = vshrl.u32 %v253, 7
    %v255 = vsub.s32 0, %v254
    %v256 = vrot.slane %v251, %v255
    %v259 = vsel %vm141, %v241, 0
    %v262 = vsel %vm141, %v242, 0
    %264 = vmatprep.subr.mxu0 0.0
    %265 = vmatpush1.msra.mxu0 0.0
    %266 = vmatprep.subr.mxu0 0.0
    %267 = vmatpush1.msra.mxu0 0.0
    %268 = vmatprep.subr.mxu0 0.0
    %269 = vmatpush1.msra.mxu0 0.0
    %270 = vmatprep.subr.mxu0 0.0
    %271 = vmatpush1.msra.mxu0 0.0
    %272 = vmatprep.subr.mxu0 0.0
    %273 = vmatpush1.msra.mxu0 0.0
    %274 = vmatprep.subr.mxu0 0.0
    %275 = vmatpush1.msra.mxu0 0.0
    %276 = vmatprep.subr.mxu0 0.0
    %277 = vmatpush1.msra.mxu0 0.0
    %278 = vmatprep.subr.mxu0 0.0
    %279 = vmatpush1.msra.mxu0 0.0
    %280 = vmatprep.subr.mxu0 0.0
    %281 = vmatpush1.msra.mxu0 %v250
    %282 = vmatprep.subr.mxu0 0.0
    %283 = vmatpush1.msra.mxu0 %v249
    %284 = vmatprep.subr.mxu0 0.0
    %285 = vmatpush1.msra.mxu0 %v248
    %286 = vmatprep.subr.mxu0 0.0
    %287 = vmatpush1.msra.mxu0 %v247
    %288 = vmatprep.subr.mxu0 0.0
    %289 = vmatpush1.msra.mxu0 %v246
    %290 = vmatprep.subr.mxu0 0.0
    %291 = vmatpush1.msra.mxu0 %v245
    %292 = vmatprep.subr.mxu0 0.0
    %293 = vmatpush1.msra.mxu0 %v244
    %294 = vmatprep.subr.mxu0 0.0
    %295 = vmatpush1.msra.mxu0 %v243
    %296 = vmatprep.subr.mxu0 0.0
    %297 = vmatpush2.msra.mxu0 0.0
    %298 = vmatprep.subr.mxu0 0.0
    %299 = vmatpush2.msra.mxu0 0.0
    %300 = vmatprep.subr.mxu0 0.0
    %301 = vmatpush2.msra.mxu0 0.0
    %302 = vmatprep.subr.mxu0 0.0
    %303 = vmatpush2.msra.mxu0 0.0
    %304 = vmatprep.subr.mxu0 0.0
    %305 = vmatpush2.msra.mxu0 0.0
    %306 = vmatprep.subr.mxu0 0.0
    %307 = vmatpush2.msra.mxu0 0.0
    %308 = vmatprep.subr.mxu0 0.0
    %309 = vmatpush2.msra.mxu0 0.0
    %310 = vmatprep.subr.mxu0 0.0
    %311 = vmatpush2.msra.mxu0 0.0
    %312 = vmatprep.subr.mxu0 0.0
    %313 = vmatpush2.msra.mxu0 0.0
    %314 = vmatprep.subr.mxu0 0.0
    %315 = vmatpush2.msra.mxu0 0.0
    %316 = vmatprep.subr.mxu0 0.0
    %317 = vmatpush2.msra.mxu0 0.0
    %318 = vmatprep.subr.mxu0 0.0
    %319 = vmatpush2.msra.mxu0 0.0
    %320 = vmatprep.subr.mxu0 0.0
    %321 = vmatpush2.msra.mxu0 0.0
    %322 = vmatprep.subr.mxu0 0.0
    %323 = vmatpush2.msra.mxu0 0.0
    %324 = vmatprep.subr.mxu0 0.0
    %325 = vmatpush2.msra.mxu0 0.0
    %326 = vmatprep.subr.mxu0 0.0
    %327 = vmatpush2.msra.mxu0 0.0
    %328 = vmatprep.mubr.f32.mxu0 0.0
    %329 = vmatmul.mubr.f32.gmra.mxu0 %v259
    %v330 = vpop.f32.mrf.mxu0
    %v331 = vadd.f32 %v256, %v330
    %v332 = vpop.f32.mrf.mxu0
    %333 = vmatprep.mubr.f32.mxu0 0.0
    %334 = vmatmul.mubr.f32.gmra.mxu0 %v262
    %v335 = vpop.f32.mrf.mxu0
    %v336 = vadd.f32 %v256, %v335
    %v337 = vpop.f32.mrf.mxu0
    %338 = vdwg.mxu0
    %v339 = vtanh.pop %v331
    %v340 = vtanh.pop %v336
    %vm341 = vcmp.ge.f32.partialorder %v331, 0.0
    %vm342 = vcmp.ge.f32.partialorder %v336, 0.0
    %v343 = vmul.f32 %v331, 0.01
    %v344 = vmul.f32 %v336, 0.01
    %v345 = vsel %vm341, %v331, %v343
    %v346 = vsel %vm342, %v336, %v344
    %349 = vrot.lane.b32.xlu0 %v345, 96
    %v350 = vpop.permute.xlu0 %349
    %351 = vrot.lane.b32.xlu0 %v346, 96
    %v352 = vpop.permute.xlu0 %351
    %v355 = vmul.f32 %v339, %v350
    %v356 = vmul.f32 %v340, %v352
    %v357 = vld [vmem:[%s5] sm:$0x1]
    %v358 = vld [vmem:[%s5 + $0x1] sm:$0x1]
    %vm359 = vcmask 261120
    %v361 = vsel %vm359, %v239, 0
    %v364 = vsel %vm359, %v355, 0
    %366 = vmatprep.subr.mxu0 0.0
    %367 = vmatpush1.xpose.msra.mxu0 0.0
    %368 = vmatprep.subr.mxu0 0.0
    %369 = vmatpush1.xpose.msra.mxu0 0.0
    %370 = vmatprep.subr.mxu0 0.0
    %371 = vmatpush1.xpose.msra.mxu0 0.0
    %372 = vmatprep.subr.mxu0 0.0
    %373 = vmatpush1.xpose.msra.mxu0 0.0
    %374 = vmatprep.subr.mxu0 0.0
    %375 = vmatpush1.xpose.msra.mxu0 0.0
    %376 = vmatprep.subr.mxu0 0.0
    %377 = vmatpush1.xpose.msra.mxu0 0.0
    %378 = vmatprep.subr.mxu0 0.0
    %379 = vmatpush1.xpose.msra.mxu0 0.0
    %380 = vmatprep.subr.mxu0 0.0
    %381 = vmatpush1.xpose.msra.mxu0 0.0
    %382 = vmatprep.subr.mxu0 0.0
    %383 = vmatpush1.xpose.msra.mxu0 0.0
    %384 = vmatprep.subr.mxu0 0.0
    %385 = vmatpush1.xpose.msra.mxu0 0.0
    %386 = vmatprep.subr.mxu0 0.0
    %387 = vmatpush1.xpose.msra.mxu0 0.0
    %388 = vmatprep.subr.mxu0 0.0
    %389 = vmatpush1.xpose.msra.mxu0 0.0
    %390 = vmatprep.subr.mxu0 0.0
    %391 = vmatpush1.xpose.msra.mxu0 0.0
    %392 = vmatprep.subr.mxu0 0.0
    %393 = vmatpush1.xpose.msra.mxu0 0.0
    %394 = vmatprep.subr.mxu0 0.0
    %395 = vmatpush1.xpose.msra.mxu0 0.0
    %396 = vmatprep.subr.mxu0 0.0
    %397 = vmatpush1.xpose.msra.mxu0 %v364
    %398 = vmatprep.subr.mxu0 0.0
    %399 = vmatpush2.xpose.msra.mxu0 0.0
    %400 = vmatprep.subr.mxu0 0.0
    %401 = vmatpush2.xpose.msra.mxu0 0.0
    %402 = vmatprep.subr.mxu0 0.0
    %403 = vmatpush2.xpose.msra.mxu0 0.0
    %404 = vmatprep.subr.mxu0 0.0
    %405 = vmatpush2.xpose.msra.mxu0 0.0
    %406 = vmatprep.subr.mxu0 0.0
    %407 = vmatpush2.xpose.msra.mxu0 0.0
    %408 = vmatprep.subr.mxu0 0.0
    %409 = vmatpush2.xpose.msra.mxu0 0.0
    %410 = vmatprep.subr.mxu0 0.0
    %411 = vmatpush2.xpose.msra.mxu0 0.0
    %412 = vmatprep.subr.mxu0 0.0
    %413 = vmatpush2.xpose.msra.mxu0 0.0
    %414 = vmatprep.subr.mxu0 0.0
    %415 = vmatpush2.xpose.msra.mxu0 0.0
    %416 = vmatprep.subr.mxu0 0.0
    %417 = vmatpush2.xpose.msra.mxu0 0.0
    %418 = vmatprep.subr.mxu0 0.0
    %419 = vmatpush2.xpose.msra.mxu0 0.0
    %420 = vmatprep.subr.mxu0 0.0
    %421 = vmatpush2.xpose.msra.mxu0 0.0
    %422 = vmatprep.subr.mxu0 0.0
    %423 = vmatpush2.xpose.msra.mxu0 0.0
    %424 = vmatprep.subr.mxu0 0.0
    %425 = vmatpush2.xpose.msra.mxu0 0.0
    %426 = vmatprep.subr.mxu0 0.0
    %427 = vmatpush2.xpose.msra.mxu0 0.0
    %428 = vmatprep.subr.mxu0 0.0
    %429 = vmatpush2.xpose.msra.mxu0 0.0
    %430 = vmatprep.mubr.f32.mxu0 0.0
    %431 = vmatmul.mubr.f32.gmra.mxu0 %v361
    %v432 = vpop.f32.mrf.mxu0
    %v433 = vadd.f32 0.0, %v432
    %v434 = vpop.f32.mrf.mxu0
    %435 = vdwg.mxu0
    %v437 = vsel %vm359, %v240, 0
    %v440 = vsel %vm359, %v356, 0
    %442 = vmatprep.subr.mxu0 0.0
    %443 = vmatpush1.xpose.msra.mxu0 0.0
    %444 = vmatprep.subr.mxu0 0.0
    %445 = vmatpush1.xpose.msra.mxu0 0.0
    %446 = vmatprep.subr.mxu0 0.0
    %447 = vmatpush1.xpose.msra.mxu0 0.0
    %448 = vmatprep.subr.mxu0 0.0
    %449 = vmatpush1.xpose.msra.mxu0 0.0
    %450 = vmatprep.subr.mxu0 0.0
    %451 = vmatpush1.xpose.msra.mxu0 0.0
    %452 = vmatprep.subr.mxu0 0.0
    %453 = vmatpush1.xpose.msra.mxu0 0.0
    %454 = vmatprep.subr.mxu0 0.0
    %455 = vmatpush1.xpose.msra.mxu0 0.0
    %456 = vmatprep.subr.mxu0 0.0
    %457 = vmatpush1.xpose.msra.mxu0 0.0
    %458 = vmatprep.subr.mxu0 0.0
    %459 = vmatpush1.xpose.msra.mxu0 0.0
    %460 = vmatprep.subr.mxu0 0.0
    %461 = vmatpush1.xpose.msra.mxu0 0.0
    %462 = vmatprep.subr.mxu0 0.0
    %463 = vmatpush1.xpose.msra.mxu0 0.0
    %464 = vmatprep.subr.mxu0 0.0
    %465 = vmatpush1.xpose.msra.mxu0 0.0
    %466 = vmatprep.subr.mxu0 0.0
    %467 = vmatpush1.xpose.msra.mxu0 0.0
    %468 = vmatprep.subr.mxu0 0.0
    %469 = vmatpush1.xpose.msra.mxu0 0.0
    %470 = vmatprep.subr.mxu0 0.0
    %471 = vmatpush1.xpose.msra.mxu0 0.0
    %472 = vmatprep.subr.mxu0 0.0
    %473 = vmatpush1.xpose.msra.mxu0 %v440
    %474 = vmatprep.subr.mxu0 0.0
    %475 = vmatpush2.xpose.msra.mxu0 0.0
    %476 = vmatprep.subr.mxu0 0.0
    %477 = vmatpush2.xpose.msra.mxu0 0.0
    %478 = vmatprep.subr.mxu0 0.0
    %479 = vmatpush2.xpose.msra.mxu0 0.0
    %480 = vmatprep.subr.mxu0 0.0
    %481 = vmatpush2.xpose.msra.mxu0 0.0
    %482 = vmatprep.subr.mxu0 0.0
    %483 = vmatpush2.xpose.msra.mxu0 0.0
    %484 = vmatprep.subr.mxu0 0.0
    %485 = vmatpush2.xpose.msra.mxu0 0.0
    %486 = vmatprep.subr.mxu0 0.0
    %487 = vmatpush2.xpose.msra.mxu0 0.0
    %488 = vmatprep.subr.mxu0 0.0
    %489 = vmatpush2.xpose.msra.mxu0 0.0
    %490 = vmatprep.subr.mxu0 0.0
    %491 = vmatpush2.xpose.msra.mxu0 0.0
    %492 = vmatprep.subr.mxu0 0.0
    %493 = vmatpush2.xpose.msra.mxu0 0.0
    %494 = vmatprep.subr.mxu0 0.0
    %495 = vmatpush2.xpose.msra.mxu0 0.0
    %496 = vmatprep.subr.mxu0 0.0
    %497 = vmatpush2.xpose.msra.mxu0 0.0
    %498 = vmatprep.subr.mxu0 0.0
    %499 = vmatpush2.xpose.msra.mxu0 0.0
    %500 = vmatprep.subr.mxu0 0.0
    %501 = vmatpush2.xpose.msra.mxu0 0.0
    %502 = vmatprep.subr.mxu0 0.0
    %503 = vmatpush2.xpose.msra.mxu0 0.0
    %504 = vmatprep.subr.mxu0 0.0
    %505 = vmatpush2.xpose.msra.mxu0 0.0
    %506 = vmatprep.mubr.f32.mxu0 0.0
    %507 = vmatmul.mubr.f32.gmra.mxu0 %v437
    %v508 = vpop.f32.mrf.mxu0
    %v509 = vadd.f32 0.0, %v508
    %v510 = vpop.f32.mrf.mxu0
    %511 = vdwg.mxu0
    %v514 = vlaneseq
    %v515 = vshrl.u32 %v514, 7
    %v516 = vsub.s32 0, %v515
    %v517 = vrot.slane %v357, %v516
    %v518 = vlaneseq
    %v519 = vshrl.u32 %v518, 7
    %v520 = vsub.s32 0, %v519
    %v521 = vrot.slane %v358, %v520
    %v524 = vmul.f32 %v433, %v517
    %v525 = vmul.f32 %v509, %v521
    %v526 = vsub.f32 %v357, 1.0
    %v527 = vsub.f32 %v358, 1.0
    %v528 = vmul.f32 %v526, 1e+13
    %v529 = vmul.f32 %v527, 1e+13
    %v532 = vlaneseq
    %v533 = vshrl.u32 %v532, 7
    %v534 = vsub.s32 0, %v533
    %v535 = vrot.slane %v528, %v534
    %v536 = vlaneseq
    %v537 = vshrl.u32 %v536, 7
    %v538 = vsub.s32 0, %v537
    %v539 = vrot.slane %v529, %v538
    %v542 = vadd.f32 %v524, %v535
    %v543 = vadd.f32 %v525, %v539
    %vm544 = vcmask 64512
    %v545 = vsel %vm544, %v542, -inf
    %546 = vmax.xlane.f32.xlu0 %v545
    %v547 = vpop.xlane.xlu0 %546
    %v548 = vsel %vm544, %v543, -inf
    %549 = vmax.xlane.f32.xlu0 %v548
    %v550 = vpop.xlane.xlu0 %549
    %v551 = vsub.f32 %v542, %v547
    %v552 = vsub.f32 %v543, %v550
    %v553 = vmul.f32 %v551, 1.442695
    %v554 = vpow.pop %v553
    %v555 = vmul.f32 %v552, 1.442695
    %v556 = vpow.pop %v555
    %v557 = vsel %vm544, %v554, 0.0
    %558 = vadd.xlane.f32.xlu0 %v557
    %v559 = vpop.xlane.xlu0 %558
    %v560 = vsel %vm544, %v556, 0.0
    %561 = vadd.xlane.f32.xlu0 %v560
    %v562 = vpop.xlane.xlu0 %561
    %v563 = vrcp.pop %v559
    %v564 = vrcp.pop %v562
    %v565 = vmul.f32 %v554, %v563
    %v566 = vmul.f32 %v556, %v564
    %v567 = vld [vmem:[%s2] sm:$0xff]
    %v568 = vld [vmem:[%s2 + $0x8] sm:$0xff]
    %v569 = vld [vmem:[#allocation5] sm:$0xff]
    %v570 = vld [vmem:[#allocation5 + $0x8] sm:$0xff]
    %v572 = vsel %vm544, %v565, 0
    %574 = vmatprep.subr.mxu0 0.0
    %575 = vmatpush1.msra.mxu0 0.0
    %576 = vmatprep.subr.mxu0 0.0
    %577 = vmatpush1.msra.mxu0 0.0
    %578 = vmatprep.subr.mxu0 0.0
    %579 = vmatpush1.msra.mxu0 0.0
    %580 = vmatprep.subr.mxu0 0.0
    %581 = vmatpush1.msra.mxu0 0.0
    %582 = vmatprep.subr.mxu0 0.0
    %583 = vmatpush1.msra.mxu0 0.0
    %584 = vmatprep.subr.mxu0 0.0
    %585 = vmatpush1.msra.mxu0 0.0
    %586 = vmatprep.subr.mxu0 0.0
    %587 = vmatpush1.msra.mxu0 0.0
    %588 = vmatprep.subr.mxu0 0.0
    %589 = vmatpush1.msra.mxu0 0.0
    %590 = vmatprep.subr.mxu0 0.0
    %591 = vmatpush1.msra.mxu0 0.0
    %592 = vmatprep.subr.mxu0 0.0
    %593 = vmatpush1.msra.mxu0 0.0
    %594 = vmatprep.subr.mxu0 0.0
    %595 = vmatpush1.msra.mxu0 0.0
    %596 = vmatprep.subr.mxu0 0.0
    %597 = vmatpush1.msra.mxu0 0.0
    %598 = vmatprep.subr.mxu0 0.0
    %599 = vmatpush1.msra.mxu0 0.0
    %600 = vmatprep.subr.mxu0 0.0
    %601 = vmatpush1.msra.mxu0 0.0
    %602 = vmatprep.subr.mxu0 0.0
    %603 = vmatpush1.msra.mxu0 0.0
    %604 = vmatprep.subr.mxu0 0.0
    %605 = vmatpush1.msra.mxu0 %v569
    %606 = vmatprep.subr.mxu0 0.0
    %607 = vmatpush2.msra.mxu0 0.0
    %608 = vmatprep.subr.mxu0 0.0
    %609 = vmatpush2.msra.mxu0 0.0
    %610 = vmatprep.subr.mxu0 0.0
    %611 = vmatpush2.msra.mxu0 0.0
    %612 = vmatprep.subr.mxu0 0.0
    %613 = vmatpush2.msra.mxu0 0.0
    %614 = vmatprep.subr.mxu0 0.0
    %615 = vmatpush2.msra.mxu0 0.0
    %616 = vmatprep.subr.mxu0 0.0
    %617 = vmatpush2.msra.mxu0 0.0
    %618 = vmatprep.subr.mxu0 0.0
    %619 = vmatpush2.msra.mxu0 0.0
    %620 = vmatprep.subr.mxu0 0.0
    %621 = vmatpush2.msra.mxu0 0.0
    %622 = vmatprep.subr.mxu0 0.0
    %623 = vmatpush2.msra.mxu0 0.0
    %624 = vmatprep.subr.mxu0 0.0
    %625 = vmatpush2.msra.mxu0 0.0
    %626 = vmatprep.subr.mxu0 0.0
    %627 = vmatpush2.msra.mxu0 0.0
    %628 = vmatprep.subr.mxu0 0.0
    %629 = vmatpush2.msra.mxu0 0.0
    %630 = vmatprep.subr.mxu0 0.0
    %631 = vmatpush2.msra.mxu0 0.0
    %632 = vmatprep.subr.mxu0 0.0
    %633 = vmatpush2.msra.mxu0 0.0
    %634 = vmatprep.subr.mxu0 0.0
    %635 = vmatpush2.msra.mxu0 0.0
    %636 = vmatprep.subr.mxu0 0.0
    %637 = vmatpush2.msra.mxu0 0.0
    %638 = vmatprep.mubr.f32.mxu0 0.0
    %639 = vmatmul.mubr.f32.gmra.mxu0 %v572
    %v640 = vpop.f32.mrf.mxu0
    %v641 = vadd.f32 0.0, %v640
    %v642 = vpop.f32.mrf.mxu0
    %643 = vdwg.mxu0
    %v645 = vsel %vm544, %v566, 0
    %647 = vmatprep.subr.mxu0 0.0
    %648 = vmatpush1.msra.mxu0 0.0
    %649 = vmatprep.subr.mxu0 0.0
    %650 = vmatpush1.msra.mxu0 0.0
    %651 = vmatprep.subr.mxu0 0.0
    %652 = vmatpush1.msra.mxu0 0.0
    %653 = vmatprep.subr.mxu0 0.0
    %654 = vmatpush1.msra.mxu0 0.0
    %655 = vmatprep.subr.mxu0 0.0
    %656 = vmatpush1.msra.mxu0 0.0
    %657 = vmatprep.subr.mxu0 0.0
    %658 = vmatpush1.msra.mxu0 0.0
    %659 = vmatprep.subr.mxu0 0.0
    %660 = vmatpush1.msra.mxu0 0.0
    %661 = vmatprep.subr.mxu0 0.0
    %662 = vmatpush1.msra.mxu0 0.0
    %663 = vmatprep.subr.mxu0 0.0
    %664 = vmatpush1.msra.mxu0 0.0
    %665 = vmatprep.subr.mxu0 0.0
    %666 = vmatpush1.msra.mxu0 0.0
    %667 = vmatprep.subr.mxu0 0.0
    %668 = vmatpush1.msra.mxu0 0.0
    %669 = vmatprep.subr.mxu0 0.0
    %670 = vmatpush1.msra.mxu0 0.0
    %671 = vmatprep.subr.mxu0 0.0
    %672 = vmatpush1.msra.mxu0 0.0
    %673 = vmatprep.subr.mxu0 0.0
    %674 = vmatpush1.msra.mxu0 0.0
    %675 = vmatprep.subr.mxu0 0.0
    %676 = vmatpush1.msra.mxu0 0.0
    %677 = vmatprep.subr.mxu0 0.0
    %678 = vmatpush1.msra.mxu0 %v570
    %679 = vmatprep.subr.mxu0 0.0
    %680 = vmatpush2.msra.mxu0 0.0
    %681 = vmatprep.subr.mxu0 0.0
    %682 = vmatpush2.msra.mxu0 0.0
    %683 = vmatprep.subr.mxu0 0.0
    %684 = vmatpush2.msra.mxu0 0.0
    %685 = vmatprep.subr.mxu0 0.0
    %686 = vmatpush2.msra.mxu0 0.0
    %687 = vmatprep.subr.mxu0 0.0
    %688 = vmatpush2.msra.mxu0 0.0
    %689 = vmatprep.subr.mxu0 0.0
    %690 = vmatpush2.msra.mxu0 0.0
    %691 = vmatprep.subr.mxu0 0.0
    %692 = vmatpush2.msra.mxu0 0.0
    %693 = vmatprep.subr.mxu0 0.0
    %694 = vmatpush2.msra.mxu0 0.0
    %695 = vmatprep.subr.mxu0 0.0
    %696 = vmatpush2.msra.mxu0 0.0
    %697 = vmatprep.subr.mxu0 0.0
    %698 = vmatpush2.msra.mxu0 0.0
    %699 = vmatprep.subr.mxu0 0.0
    %700 = vmatpush2.msra.mxu0 0.0
    %701 = vmatprep.subr.mxu0 0.0
    %702 = vmatpush2.msra.mxu0 0.0
    %703 = vmatprep.subr.mxu0 0.0
    %704 = vmatpush2.msra.mxu0 0.0
    %705 = vmatprep.subr.mxu0 0.0
    %706 = vmatpush2.msra.mxu0 0.0
    %707 = vmatprep.subr.mxu0 0.0
    %708 = vmatpush2.msra.mxu0 0.0
    %709 = vmatprep.subr.mxu0 0.0
    %710 = vmatpush2.msra.mxu0 0.0
    %711 = vmatprep.mubr.f32.mxu0 0.0
    %712 = vmatmul.mubr.f32.gmra.mxu0 %v645
    %v713 = vpop.f32.mrf.mxu0
    %v714 = vadd.f32 0.0, %v713
    %v715 = vpop.f32.mrf.mxu0
    %716 = vdwg.mxu0
    %718 = vset.pattern.permute.xlu0 0
    %719 = vperm.xlu0 %718, %v567
    %v720 = vpop.permute.xlu0 %719
    %723 = vset.pattern.permute.xlu0 0
    %724 = vperm.xlu0 %723, %v568
    %v725 = vpop.permute.xlu0 %724
    %v727 = vmul.f32 %v641, %v720
    %v728 = vmul.f32 %v714, %v725
    %v729 = vld [vmem:[%s0] sm:$0xff]
    %v730 = vld [vmem:[%s0 + $0x8] sm:$0xff]
    %733 = vrot.lane.b32.xlu0 %v729, 64
    %v734 = vpop.permute.xlu0 %733
    %735 = vrot.lane.b32.xlu0 %v730, 64
    %v736 = vpop.permute.xlu0 %735
    %v739 = vsel %vm141, %v727, %v734
    %v740 = vsel %vm141, %v728, %v736
    %v741 = vld [vmem:[#allocation11] sm:$0xff]
    %v742 = vld [vmem:[#allocation11 + $0x8] sm:$0xff]
    %v743 = vld [vmem:[#allocation11 + $0x10] sm:$0xff]
    %v744 = vld [vmem:[#allocation11 + $0x18] sm:$0xff]
    %v745 = vld [vmem:[#allocation11 + $0x20] sm:$0xff]
    %v746 = vld [vmem:[#allocation11 + $0x28] sm:$0xff]
    %v747 = vld [vmem:[#allocation11 + $0x30] sm:$0xff]
    %v748 = vld [vmem:[#allocation11 + $0x38] sm:$0xff]
    %v749 = vld [vmem:[#allocation11 + $0x40] sm:$0xff]
    %v750 = vld [vmem:[#allocation11 + $0x48] sm:$0xff]
    %v751 = vld [vmem:[#allocation11 + $0x50] sm:$0xff]
    %v752 = vld [vmem:[#allocation11 + $0x58] sm:$0xff]
    %v753 = vld [vmem:[#allocation11 + $0x60] sm:$0xff]
    %v754 = vld [vmem:[#allocation11 + $0x68] sm:$0xff]
    %v755 = vld [vmem:[#allocation11 + $0x70] sm:$0xff]
    %v756 = vld [vmem:[#allocation11 + $0x78] sm:$0xff]
    %v757 = vld [vmem:[%s11] sm:$0x1]
    %v759 = vlaneseq
    %v760 = vshrl.u32 %v759, 7
    %v761 = vsub.s32 0, %v760
    %v762 = vrot.slane %v757, %v761
    %764 = vmatprep.subr.mxu0 0.0
    %765 = vmatpush1.msra.mxu0 %v756
    %766 = vmatprep.subr.mxu0 0.0
    %767 = vmatpush1.msra.mxu0 %v755
    %768 = vmatprep.subr.mxu0 0.0
    %769 = vmatpush1.msra.mxu0 %v754
    %770 = vmatprep.subr.mxu0 0.0
    %771 = vmatpush1.msra.mxu0 %v753
    %772 = vmatprep.subr.mxu0 0.0
    %773 = vmatpush1.msra.mxu0 %v752
    %774 = vmatprep.subr.mxu0 0.0
    %775 = vmatpush1.msra.mxu0 %v751
    %776 = vmatprep.subr.mxu0 0.0
    %777 = vmatpush1.msra.mxu0 %v750
    %778 = vmatprep.subr.mxu0 0.0
    %779 = vmatpush1.msra.mxu0 %v749
    %780 = vmatprep.subr.mxu0 0.0
    %781 = vmatpush1.msra.mxu0 %v748
    %782 = vmatprep.subr.mxu0 0.0
    %783 = vmatpush1.msra.mxu0 %v747
    %784 = vmatprep.subr.mxu0 0.0
    %785 = vmatpush1.msra.mxu0 %v746
    %786 = vmatprep.subr.mxu0 0.0
    %787 = vmatpush1.msra.mxu0 %v745
    %788 = vmatprep.subr.mxu0 0.0
    %789 = vmatpush1.msra.mxu0 %v744
    %790 = vmatprep.subr.mxu0 0.0
    %791 = vmatpush1.msra.mxu0 %v743
    %792 = vmatprep.subr.mxu0 0.0
    %793 = vmatpush1.msra.mxu0 %v742
    %794 = vmatprep.subr.mxu0 0.0
    %795 = vmatpush1.msra.mxu0 %v741
    %796 = vmatprep.subr.mxu0 0.0
    %797 = vmatpush2.msra.mxu0 0.0
    %798 = vmatprep.subr.mxu0 0.0
    %799 = vmatpush2.msra.mxu0 0.0
    %800 = vmatprep.subr.mxu0 0.0
    %801 = vmatpush2.msra.mxu0 0.0
    %802 = vmatprep.subr.mxu0 0.0
    %803 = vmatpush2.msra.mxu0 0.0
    %804 = vmatprep.subr.mxu0 0.0
    %805 = vmatpush2.msra.mxu0 0.0
    %806 = vmatprep.subr.mxu0 0.0
    %807 = vmatpush2.msra.mxu0 0.0
    %808 = vmatprep.subr.mxu0 0.0
    %809 = vmatpush2.msra.mxu0 0.0
    %810 = vmatprep.subr.mxu0 0.0
    %811 = vmatpush2.msra.mxu0 0.0
    %812 = vmatprep.subr.mxu0 0.0
    %813 = vmatpush2.msra.mxu0 0.0
    %814 = vmatprep.subr.mxu0 0.0
    %815 = vmatpush2.msra.mxu0 0.0
    %816 = vmatprep.subr.mxu0 0.0
    %817 = vmatpush2.msra.mxu0 0.0
    %818 = vmatprep.subr.mxu0 0.0
    %819 = vmatpush2.msra.mxu0 0.0
    %820 = vmatprep.subr.mxu0 0.0
    %821 = vmatpush2.msra.mxu0 0.0
    %822 = vmatprep.subr.mxu0 0.0
    %823 = vmatpush2.msra.mxu0 0.0
    %824 = vmatprep.subr.mxu0 0.0
    %825 = vmatpush2.msra.mxu0 0.0
    %826 = vmatprep.subr.mxu0 0.0
    %827 = vmatpush2.msra.mxu0 0.0
    %828 = vmatprep.mubr.f32.mxu0 0.0
    %829 = vmatmul.mubr.f32.gmra.mxu0 %v739
    %v830 = vpop.f32.mrf.mxu0
    %v831 = vadd.f32 %v762, %v830
    %v832 = vpop.f32.mrf.mxu0
    %833 = vmatprep.mubr.f32.mxu0 0.0
    %834 = vmatmul.mubr.f32.gmra.mxu0 %v740
    %v835 = vpop.f32.mrf.mxu0
    %v836 = vadd.f32 %v762, %v835
    %v837 = vpop.f32.mrf.mxu0
    %838 = vdwg.mxu0
    %v839 = vxor.u32 %v831, 2147483648
    %v840 = vxor.u32 %v836, 2147483648
    %v841 = vmul.f32 %v839, 1.442695
    %v842 = vpow.pop %v841
    %v843 = vmul.f32 %v840, 1.442695
    %v844 = vpow.pop %v843
    %v845 = vadd.f32 %v842, 1.0
    %v846 = vadd.f32 %v844, 1.0
    %v847 = vrcp.pop %v845
    %v848 = vmul.f32 1.0, %v847
    %v849 = vrcp.pop %v846
    %v850 = vmul.f32 1.0, %v849
    %v851 = vmul.f32 %v848, %v739
    %v852 = vmul.f32 %v850, %v740
    %853 = vst [vmem:[#allocation13] sm:$0xff] %v851
    %854 = vst [vmem:[#allocation13 + $0x8] sm:$0xff] %v852
    // Predicated region
    $region74: #{tpu_custom_call.1} parent=1 // pred_check
      _
    $region75: #{tpu_custom_call.1} parent=1 // pred_check_branch
      %856 = sbr.rel (0) target = $region77
    $region76: #{tpu_custom_call.1} parent=1 // pred_region
      %s858 = ssub.s32 256, 256
      %859 = vsyncadd [#allocation4], %s858
      %s860 = sshll.u32 [#allocation13], 4
      %s861 = int_to_ptr.vmem [resolvable:$true] %s860
      %866 = dma.vmem_to_hbm [thread:$0]  %s861, 256, %s12, [#allocation4], 128, 128, 8
    $region77: #{tpu_custom_call.1} parent=1 // pred_fallthru
      _
    // Predicated region
    $region78: #{tpu_custom_call.1} parent=1 // pred_check
      _
    $region79: #{tpu_custom_call.1} parent=1 // pred_check_branch
      %868 = sbr.rel (0) target = $region81
    $region80: #{tpu_custom_call.1} parent=1 // pred_region
      %869 = dma.done [#allocation4], 256
    $region81: #{tpu_custom_call.1} parent=1 // pred_fallthru
      _
    %870 = vsyncpa [#allocation3], 1
    %871 = vsyncpa [#allocation6], 1
    %872 = vsyncpa [#allocation9], 1
    %873 = vsyncpa [#allocation12], 1
    %874 = vsyncpa [#allocation4], 1

// kernel: tpu_custom_call.1
$region0: #{tpu_custom_call.1}
  #allocation0 [shape = 'u32[]', space=smem, size = 0x4, offset = 0x4, fixed_abs, tag = 'smem constant byte address 0x4 - core index']
  #allocation1 [shape = 'u32[144,128]{1,0:T(1,128)}', space=vmem, size = 0x12000, scoped, tag = 'internal scratch']
  %s0 = inlined_call_operand.vmem [shape: f32[2,8,64], index: 0, kind: input, shape index: {}]
  %s1 = inlined_call_operand.hbm [shape: f32[2,8,64], index: 1, kind: input, shape index: {}]
  %s2 = inlined_call_operand.vmem [shape: f32[2,8,1], index: 2, kind: input, shape index: {}]
  %s3 = inlined_call_operand.hbm [shape: f32[2,8,64], index: 3, kind: input, shape index: {}]
  %s4 = inlined_call_operand.hbm [shape: f32[2,8,64], index: 4, kind: input, shape index: {}]
  %s5 = inlined_call_operand.vmem [shape: f32[2,1,8], index: 5, kind: input, shape index: {}]
  %s6 = inlined_call_operand.hbm [shape: f32[64,64], index: 6, kind: input, shape index: {}]
  %s7 = inlined_call_operand.vmem [shape: f32[1,64], index: 7, kind: input, shape index: {}]
  %s8 = inlined_call_operand.hbm [shape: f32[64,64], index: 8, kind: input, shape index: {}]
  %s9 = inlined_call_operand.vmem [shape: f32[1,64], index: 9, kind: input, shape index: {}]
  %s10 = inlined_call_operand.hbm [shape: f32[128,128], index: 10, kind: input, shape index: {}]
  %s11 = inlined_call_operand.vmem [shape: f32[1,128], index: 11, kind: input, shape index: {}]
  %s12 = inlined_call_operand.hbm [shape: f32[2,8,128], index: 12, kind: output, shape index: {}]
  %s13 = sld [smem:[#allocation0]]
  $region82: #{tpu_custom_call.1} parent=0
    _
  %s15 = ssub.s32 1, %s13
  %s16 = scalar_select 0, %s15, %s13
  $region1: #{tpu_custom_call.1} parent=0
    #allocation2 [shape = 'u8[8192]{0}', space=vmem, size = 0x2000, scoped, tag = 'input window, operand 1, single buffered']
    #allocation3 [shape = 's32[1]{0}', space=sflag, size = 0x4, scoped, tag = 'scoped memory for tpu_custom_call.1']
    #allocation4 [shape = 's32[1]{0}', space=sflag, size = 0x4, scoped, tag = 'scoped memory for tpu_custom_call.1']
    #allocation5 [shape = 'u8[8192]{0}', space=vmem, size = 0x2000, scoped, tag = 'input window, operand 3, single buffered']
    #allocation6 [shape = 's32[1]{0}', space=sflag, size = 0x4, scoped, tag = 'scoped memory for tpu_custom_call.1']
    #allocation7 [shape = 'u8[8192]{0}', space=vmem, size = 0x2000, scoped, tag = 'input window, operand 4, single buffered']
    #allocation8 [shape = 'u8[32768]{0}', space=vmem, size = 0x8000, scoped, tag = 'input window, operand 6, single buffered']
    #allocation9 [shape = 's32[1]{0}', space=sflag, size = 0x4, scoped, tag = 'scoped memory for tpu_custom_call.1']
    #allocation10 [shape = 'u8[32768]{0}', space=vmem, size = 0x8000, scoped, tag = 'input window, operand 8, single buffered']
    #allocation11 [shape = 'u8[65536]{0}', space=vmem, size = 0x10000, scoped, tag = 'input window, operand 10, single buffered']
    #allocation12 [shape = 's32[1]{0}', space=sflag, size = 0x4, scoped, tag = 'scoped memory for tpu_custom_call.1']
    #allocation13 [shape = 'u8[8192]{0}', space=vmem, size = 0x2000, scoped, tag = 'output window, operand 0, single buffered']
    %17 = vsyncpa [#allocation3], 0
    %18 = vsyncpa [#allocation6], 0
    %19 = vsyncpa [#allocation9], 0
    %20 = vsyncpa [#allocation12], 0
    %21 = vsyncpa [#allocation4], 0
    // Predicated region
    $region2: #{tpu_custom_call.1} parent=1 // pred_check
      _
    $region3: #{tpu_custom_call.1} parent=1 // pred_check_branch
      %23 = sbr.rel (0) target = $region5
    $region4: #{tpu_custom_call.1} parent=1 // pred_region
      _
    $region5: #{tpu_custom_call.1} parent=1 // pred_fallthru
      _
    // Predicated region
    $region6: #{tpu_custom_call.1} parent=1 // pred_check
      _
    $region7: #{tpu_custom_call.1} parent=1 // pred_check_branch
      %25 = sbr.rel (0) target = $region9
    $region8: #{tpu_custom_call.1} parent=1 // pred_region
      %s27 = ssub.s32 256, 256
      %28 = vsyncadd [#allocation3], %s27
      %s29 = sshll.u32 [#allocation2], 4
      %s30 = int_to_ptr.vmem [resolvable:$true] %s29
      %35 = dma.hbm_to_vmem [thread:$0]  %s1, 256, %s30, [#allocation3], 128, 128, 8
    $region9: #{tpu_custom_call.1} parent=1 // pred_fallthru
      _
    // Predicated region
    $region10: #{tpu_custom_call.1} parent=1 // pred_check
      _
    $region11: #{tpu_custom_call.1} parent=1 // pred_check_branch
      %37 = sbr.rel (0) target = $region13
    $region12: #{tpu_custom_call.1} parent=1 // pred_region
      _
    $region13: #{tpu_custom_call.1} parent=1 // pred_fallthru
      _
    // Predicated region
    $region14: #{tpu_custom_call.1} parent=1 // pred_check
      _
    $region15: #{tpu_custom_call.1} parent=1 // pred_check_branch
      %39 = sbr.rel (0) target = $region17
    $region16: #{tpu_custom_call.1} parent=1 // pred_region
      %s41 = ssub.s32 256, 256
      %42 = vsyncadd [#allocation6], %s41
      %s43 = sshll.u32 [#allocation5], 4
      %s44 = int_to_ptr.vmem [resolvable:$true] %s43
      %49 = dma.hbm_to_vmem [thread:$0]  %s3, 256, %s44, [#allocation6], 128, 128, 8
    $region17: #{tpu_custom_call.1} parent=1 // pred_fallthru
      _
    // Predicated region
    $region18: #{tpu_custom_call.1} parent=1 // pred_check
      _
    $region19: #{tpu_custom_call.1} parent=1 // pred_check_branch
      %51 = sbr.rel (0) target = $region21
    $region20: #{tpu_custom_call.1} parent=1 // pred_region
      %s53 = ssub.s32 256, 256
      %54 = vsyncadd [#allocation6], %s53
      %s55 = sshll.u32 [#allocation7], 4
      %s56 = int_to_ptr.vmem [resolvable:$true] %s55
      %61 = dma.hbm_to_vmem [thread:$0]  %s4, 256, %s56, [#allocation6], 128, 128, 8
    $region21: #{tpu_custom_call.1} parent=1 // pred_fallthru
      _
    // Predicated region
    $region22: #{tpu_custom_call.1} parent=1 // pred_check
      _
    $region23: #{tpu_custom_call.1} parent=1 // pred_check_branch
      %63 = sbr.rel (0) target = $region25
    $region24: #{tpu_custom_call.1} parent=1 // pred_region
      _
    $region25: #{tpu_custom_call.1} parent=1 // pred_fallthru
      _
    // Predicated region
    $region26: #{tpu_custom_call.1} parent=1 // pred_check
      _
    $region27: #{tpu_custom_call.1} parent=1 // pred_check_branch
      %65 = sbr.rel (0) target = $region29
    $region28: #{tpu_custom_call.1} parent=1 // pred_region
      %s67 = ssub.s32 1024, 1024
      %68 = vsyncadd [#allocation9], %s67
      %s69 = sshll.u32 [#allocation8], 4
      %s70 = int_to_ptr.vmem [resolvable:$true] %s69
      %75 = dma.hbm_to_vmem [thread:$0]  %s6, 1024, %s70, [#allocation9], 128, 128, 8
    $region29: #{tpu_custom_call.1} parent=1 // pred_fallthru
      _
    // Predicated region
    $region30: #{tpu_custom_call.1} parent=1 // pred_check
      _
    $region31: #{tpu_custom_call.1} parent=1 // pred_check_branch
      %77 = sbr.rel (0) target = $region33
    $region32: #{tpu_custom_call.1} parent=1 // pred_region
      _
    $region33: #{tpu_custom_call.1} parent=1 // pred_fallthru
      _
    // Predicated region
    $region34: #{tpu_custom_call.1} parent=1 // pred_check
      _
    $region35: #{tpu_custom_call.1} parent=1 // pred_check_branch
      %79 = sbr.rel (0) target = $region37
    $region36: #{tpu_custom_call.1} parent=1 // pred_region
      %s81 = ssub.s32 1024, 1024
      %82 = vsyncadd [#allocation9], %s81
      %s83 = sshll.u32 [#allocation10], 4
      %s84 = int_to_ptr.vmem [resolvable:$true] %s83
      %89 = dma.hbm_to_vmem [thread:$0]  %s8, 1024, %s84, [#allocation9], 128, 128, 8
    $region37: #{tpu_custom_call.1} parent=1 // pred_fallthru
      _
    // Predicated region
    $region38: #{tpu_custom_call.1} parent=1 // pred_check
      _
    $region39: #{tpu_custom_call.1} parent=1 // pred_check_branch
      %91 = sbr.rel (0) target = $region41
    $region40: #{tpu_custom_call.1} parent=1 // pred_region
      _
    $region41: #{tpu_custom_call.1} parent=1 // pred_fallthru
      _
    // Predicated region
    $region42: #{tpu_custom_call.1} parent=1 // pred_check
      _
    $region43: #{tpu_custom_call.1} parent=1 // pred_check_branch
      %93 = sbr.rel (0) target = $region45
    $region44: #{tpu_custom_call.1} parent=1 // pred_region
      %s95 = ssub.s32 2048, 2048
      %96 = vsyncadd [#allocation12], %s95
      %s97 = sshll.u32 [#allocation11], 4
      %s98 = int_to_ptr.vmem [resolvable:$true] %s97
      %103 = dma.hbm_to_vmem [thread:$0]  %s10, 2048, %s98, [#allocation12], 128, 128, 8
    $region45: #{tpu_custom_call.1} parent=1 // pred_fallthru
      _
    // Predicated region
    $region46: #{tpu_custom_call.1} parent=1 // pred_check
      _
    $region47: #{tpu_custom_call.1} parent=1 // pred_check_branch
      %105 = sbr.rel (0) target = $region49
    $region48: #{tpu_custom_call.1} parent=1 // pred_region
      _
    $region49: #{tpu_custom_call.1} parent=1 // pred_fallthru
      _
    // Predicated region
    $region50: #{tpu_custom_call.1} parent=1 // pred_check
      _
    $region51: #{tpu_custom_call.1} parent=1 // pred_check_branch
      %107 = sbr.rel (0) target = $region53
    $region52: #{tpu_custom_call.1} parent=1 // pred_region
      %108 = dma.done [#allocation3], 256
    $region53: #{tpu_custom_call.1} parent=1 // pred_fallthru
      _
    // Predicated region
    $region54: #{tpu_custom_call.1} parent=1 // pred_check
      _
    $region55: #{tpu_custom_call.1} parent=1 // pred_check_branch
      %110 = sbr.rel (0) target = $region57
    $region56: #{tpu_custom_call.1} parent=1 // pred_region
      %111 = dma.done [#allocation6], 256
    $region57: #{tpu_custom_call.1} parent=1 // pred_fallthru
      _
    // Predicated region
    $region58: #{tpu_custom_call.1} parent=1 // pred_check
      _
    $region59: #{tpu_custom_call.1} parent=1 // pred_check_branch
      %113 = sbr.rel (0) target = $region61
    $region60: #{tpu_custom_call.1} parent=1 // pred_region
      %114 = dma.done [#allocation6], 256
    $region61: #{tpu_custom_call.1} parent=1 // pred_fallthru
      _
    // Predicated region
    $region62: #{tpu_custom_call.1} parent=1 // pred_check
      _
    $region63: #{tpu_custom_call.1} parent=1 // pred_check_branch
      %116 = sbr.rel (0) target = $region65
    $region64: #{tpu_custom_call.1} parent=1 // pred_region
      %117 = dma.done [#allocation9], 1024
    $region65: #{tpu_custom_call.1} parent=1 // pred_fallthru
      _
    // Predicated region
    $region66: #{tpu_custom_call.1} parent=1 // pred_check
      _
    $region67: #{tpu_custom_call.1} parent=1 // pred_check_branch
      %119 = sbr.rel (0) target = $region69
    $region68: #{tpu_custom_call.1} parent=1 // pred_region
      %120 = dma.done [#allocation9], 1024
    $region69: #{tpu_custom_call.1} parent=1 // pred_fallthru
      _
    // Predicated region
    $region70: #{tpu_custom_call.1} parent=1 // pred_check
      _
    $region71: #{tpu_custom_call.1} parent=1 // pred_check_branch
      %122 = sbr.rel (0) target = $region73
    $region72: #{tpu_custom_call.1} parent=1 // pred_region
      %123 = dma.done [#allocation12], 2048
    $region73: #{tpu_custom_call.1} parent=1 // pred_fallthru
      _
    %v124 = vld [vmem:[#allocation2] sm:$0xff]
    %v125 = vld [vmem:[#allocation2 + $0x8] sm:$0xff]
    %v126 = vld [vmem:[#allocation8] sm:$0xff]
    %v127 = vld [vmem:[#allocation8 + $0x8] sm:$0xff]
    %v128 = vld [vmem:[#allocation8 + $0x10] sm:$0xff]
    %v129 = vld [vmem:[#allocation8 + $0x18] sm:$0xff]
    %v130 = vld [vmem:[#allocation8 + $0x20] sm:$0xff]
    %v131 = vld [vmem:[#allocation8 + $0x28] sm:$0xff]
    %v132 = vld [vmem:[#allocation8 + $0x30] sm:$0xff]
    %v133 = vld [vmem:[#allocation8 + $0x38] sm:$0xff]
    %v134 = vld [vmem:[%s7] sm:$0x1]
    %v136 = vlaneseq
    %v137 = vshrl.u32 %v136, 7
    %v138 = vsub.s32 0, %v137
    %v139 = vrot.slane %v134, %v138
    %vm141 = vcmask 523264
    %v143 = vsel %vm141, %v124, 0
    %v146 = vsel %vm141, %v125, 0
    %148 = vmatprep.subr.mxu0 0.0
    %149 = vmatpush1.msra.mxu0 0.0
    %150 = vmatprep.subr.mxu0 0.0
    %151 = vmatpush1.msra.mxu0 0.0
    %152 = vmatprep.subr.mxu0 0.0
    %153 = vmatpush1.msra.mxu0 0.0
    %154 = vmatprep.subr.mxu0 0.0
    %155 = vmatpush1.msra.mxu0 0.0
    %156 = vmatprep.subr.mxu0 0.0
    %157 = vmatpush1.msra.mxu0 0.0
    %158 = vmatprep.subr.mxu0 0.0
    %159 = vmatpush1.msra.mxu0 0.0
    %160 = vmatprep.subr.mxu0 0.0
    %161 = vmatpush1.msra.mxu0 0.0
    %162 = vmatprep.subr.mxu0 0.0
    %163 = vmatpush1.msra.mxu0 0.0
    %164 = vmatprep.subr.mxu0 0.0
    %165 = vmatpush1.msra.mxu0 %v133
    %166 = vmatprep.subr.mxu0 0.0
    %167 = vmatpush1.msra.mxu0 %v132
    %168 = vmatprep.subr.mxu0 0.0
    %169 = vmatpush1.msra.mxu0 %v131
    %170 = vmatprep.subr.mxu0 0.0
    %171 = vmatpush1.msra.mxu0 %v130
    %172 = vmatprep.subr.mxu0 0.0
    %173 = vmatpush1.msra.mxu0 %v129
    %174 = vmatprep.subr.mxu0 0.0
    %175 = vmatpush1.msra.mxu0 %v128
    %176 = vmatprep.subr.mxu0 0.0
    %177 = vmatpush1.msra.mxu0 %v127
    %178 = vmatprep.subr.mxu0 0.0
    %179 = vmatpush1.msra.mxu0 %v126
    %180 = vmatprep.subr.mxu0 0.0
    %181 = vmatpush2.msra.mxu0 0.0
    %182 = vmatprep.subr.mxu0 0.0
    %183 = vmatpush2.msra.mxu0 0.0
    %184 = vmatprep.subr.mxu0 0.0
    %185 = vmatpush2.msra.mxu0 0.0
    %186 = vmatprep.subr.mxu0 0.0
    %187 = vmatpush2.msra.mxu0 0.0
    %188 = vmatprep.subr.mxu0 0.0
    %189 = vmatpush2.msra.mxu0 0.0
    %190 = vmatprep.subr.mxu0 0.0
    %191 = vmatpush2.msra.mxu0 0.0
    %192 = vmatprep.subr.mxu0 0.0
    %193 = vmatpush2.msra.mxu0 0.0
    %194 = vmatprep.subr.mxu0 0.0
    %195 = vmatpush2.msra.mxu0 0.0
    %196 = vmatprep.subr.mxu0 0.0
    %197 = vmatpush2.msra.mxu0 0.0
    %198 = vmatprep.subr.mxu0 0.0
    %199 = vmatpush2.msra.mxu0 0.0
    %200 = vmatprep.subr.mxu0 0.0
    %201 = vmatpush2.msra.mxu0 0.0
    %202 = vmatprep.subr.mxu0 0.0
    %203 = vmatpush2.msra.mxu0 0.0
    %204 = vmatprep.subr.mxu0 0.0
    %205 = vmatpush2.msra.mxu0 0.0
    %206 = vmatprep.subr.mxu0 0.0
    %207 = vmatpush2.msra.mxu0 0.0
    %208 = vmatprep.subr.mxu0 0.0
    %209 = vmatpush2.msra.mxu0 0.0
    %210 = vmatprep.subr.mxu0 0.0
    %211 = vmatpush2.msra.mxu0 0.0
    %212 = vmatprep.mubr.f32.mxu0 0.0
    %213 = vmatmul.mubr.f32.gmra.mxu0 %v143
    %v214 = vpop.f32.mrf.mxu0
    %v215 = vadd.f32 %v139, %v214
    %v216 = vpop.f32.mrf.mxu0
    %217 = vmatprep.mubr.f32.mxu0 0.0
    %218 = vmatmul.mubr.f32.gmra.mxu0 %v146
    %v219 = vpop.f32.mrf.mxu0
    %v220 = vadd.f32 %v139, %v219
    %v221 = vpop.f32.mrf.mxu0
    %222 = vdwg.mxu0
    %v223 = vtanh.pop %v215
    %v224 = vtanh.pop %v220
    %vm225 = vcmp.ge.f32.partialorder %v215, 0.0
    %vm226 = vcmp.ge.f32.partialorder %v220, 0.0
    %v227 = vmul.f32 %v215, 0.01
    %v228 = vmul.f32 %v220, 0.01
    %v229 = vsel %vm225, %v215, %v227
    %v230 = vsel %vm226, %v220, %v228
    %233 = vrot.lane.b32.xlu0 %v229, 96
    %v234 = vpop.permute.xlu0 %233
    %235 = vrot.lane.b32.xlu0 %v230, 96
    %v236 = vpop.permute.xlu0 %235
    %v239 = vmul.f32 %v223, %v234
    %v240 = vmul.f32 %v224, %v236
    %v241 = vld [vmem:[#allocation7] sm:$0xff]
    %v242 = vld [vmem:[#allocation7 + $0x8] sm:$0xff]
    %v243 = vld [vmem:[#allocation10] sm:$0xff]
    %v244 = vld [vmem:[#allocation10 + $0x8] sm:$0xff]
    %v245 = vld [vmem:[#allocation10 + $0x10] sm:$0xff]
    %v246 = vld [vmem:[#allocation10 + $0x18] sm:$0xff]
    %v247 = vld [vmem:[#allocation10 + $0x20] sm:$0xff]
    %v248 = vld [vmem:[#allocation10 + $0x28] sm:$0xff]
    %v249 = vld [vmem:[#allocation10 + $0x30] sm:$0xff]
    %v250 = vld [vmem:[#allocation10 + $0x38] sm:$0xff]
    %v251 = vld [vmem:[%s9] sm:$0x1]
    %v253 = vlaneseq
    %v254 = vshrl.u32 %v253, 7
    %v255 = vsub.s32 0, %v254
    %v256 = vrot.slane %v251, %v255
    %v259 = vsel %vm141, %v241, 0
    %v262 = vsel %vm141, %v242, 0
    %264 = vmatprep.subr.mxu0 0.0
    %265 = vmatpush1.msra.mxu0 0.0
    %266 = vmatprep.subr.mxu0 0.0
    %267 = vmatpush1.msra.mxu0 0.0
    %268 = vmatprep.subr.mxu0 0.0
    %269 = vmatpush1.msra.mxu0 0.0
    %270 = vmatprep.subr.mxu0 0.0
    %271 = vmatpush1.msra.mxu0 0.0
    %272 = vmatprep.subr.mxu0 0.0
    %273 = vmatpush1.msra.mxu0 0.0
    %274 = vmatprep.subr.mxu0 0.0
    %275 = vmatpush1.msra.mxu0 0.0
    %276 = vmatprep.subr.mxu0 0.0
    %277 = vmatpush1.msra.mxu0 0.0
    %278 = vmatprep.subr.mxu0 0.0
    %279 = vmatpush1.msra.mxu0 0.0
    %280 = vmatprep.subr.mxu0 0.0
    %281 = vmatpush1.msra.mxu0 %v250
    %282 = vmatprep.subr.mxu0 0.0
    %283 = vmatpush1.msra.mxu0 %v249
    %284 = vmatprep.subr.mxu0 0.0
    %285 = vmatpush1.msra.mxu0 %v248
    %286 = vmatprep.subr.mxu0 0.0
    %287 = vmatpush1.msra.mxu0 %v247
    %288 = vmatprep.subr.mxu0 0.0
    %289 = vmatpush1.msra.mxu0 %v246
    %290 = vmatprep.subr.mxu0 0.0
    %291 = vmatpush1.msra.mxu0 %v245
    %292 = vmatprep.subr.mxu0 0.0
    %293 = vmatpush1.msra.mxu0 %v244
    %294 = vmatprep.subr.mxu0 0.0
    %295 = vmatpush1.msra.mxu0 %v243
    %296 = vmatprep.subr.mxu0 0.0
    %297 = vmatpush2.msra.mxu0 0.0
    %298 = vmatprep.subr.mxu0 0.0
    %299 = vmatpush2.msra.mxu0 0.0
    %300 = vmatprep.subr.mxu0 0.0
    %301 = vmatpush2.msra.mxu0 0.0
    %302 = vmatprep.subr.mxu0 0.0
    %303 = vmatpush2.msra.mxu0 0.0
    %304 = vmatprep.subr.mxu0 0.0
    %305 = vmatpush2.msra.mxu0 0.0
    %306 = vmatprep.subr.mxu0 0.0
    %307 = vmatpush2.msra.mxu0 0.0
    %308 = vmatprep.subr.mxu0 0.0
    %309 = vmatpush2.msra.mxu0 0.0
    %310 = vmatprep.subr.mxu0 0.0
    %311 = vmatpush2.msra.mxu0 0.0
    %312 = vmatprep.subr.mxu0 0.0
    %313 = vmatpush2.msra.mxu0 0.0
    %314 = vmatprep.subr.mxu0 0.0
    %315 = vmatpush2.msra.mxu0 0.0
    %316 = vmatprep.subr.mxu0 0.0
    %317 = vmatpush2.msra.mxu0 0.0
    %318 = vmatprep.subr.mxu0 0.0
    %319 = vmatpush2.msra.mxu0 0.0
    %320 = vmatprep.subr.mxu0 0.0
    %321 = vmatpush2.msra.mxu0 0.0
    %322 = vmatprep.subr.mxu0 0.0
    %323 = vmatpush2.msra.mxu0 0.0
    %324 = vmatprep.subr.mxu0 0.0
    %325 = vmatpush2.msra.mxu0 0.0
    %326 = vmatprep.subr.mxu0 0.0
    %327 = vmatpush2.msra.mxu0 0.0
    %328 = vmatprep.mubr.f32.mxu0 0.0
    %329 = vmatmul.mubr.f32.gmra.mxu0 %v259
    %v330 = vpop.f32.mrf.mxu0
    %v331 = vadd.f32 %v256, %v330
    %v332 = vpop.f32.mrf.mxu0
    %333 = vmatprep.mubr.f32.mxu0 0.0
    %334 = vmatmul.mubr.f32.gmra.mxu0 %v262
    %v335 = vpop.f32.mrf.mxu0
    %v336 = vadd.f32 %v256, %v335
    %v337 = vpop.f32.mrf.mxu0
    %338 = vdwg.mxu0
    %v339 = vtanh.pop %v331
    %v340 = vtanh.pop %v336
    %vm341 = vcmp.ge.f32.partialorder %v331, 0.0
    %vm342 = vcmp.ge.f32.partialorder %v336, 0.0
    %v343 = vmul.f32 %v331, 0.01
    %v344 = vmul.f32 %v336, 0.01
    %v345 = vsel %vm341, %v331, %v343
    %v346 = vsel %vm342, %v336, %v344
    %349 = vrot.lane.b32.xlu0 %v345, 96
    %v350 = vpop.permute.xlu0 %349
    %351 = vrot.lane.b32.xlu0 %v346, 96
    %v352 = vpop.permute.xlu0 %351
    %v355 = vmul.f32 %v339, %v350
    %v356 = vmul.f32 %v340, %v352
    %v357 = vld [vmem:[%s5] sm:$0x1]
    %v358 = vld [vmem:[%s5 + $0x1] sm:$0x1]
    %vm359 = vcmask 261120
    %v361 = vsel %vm359, %v239, 0
    %v364 = vsel %vm359, %v355, 0
    %366 = vmatprep.subr.mxu0 0.0
    %367 = vmatpush1.xpose.msra.mxu0 0.0
    %368 = vmatprep.subr.mxu0 0.0
    %369 = vmatpush1.xpose.msra.mxu0 0.0
    %370 = vmatprep.subr.mxu0 0.0
    %371 = vmatpush1.xpose.msra.mxu0 0.0
    %372 = vmatprep.subr.mxu0 0.0
    %373 = vmatpush1.xpose.msra.mxu0 0.0
    %374 = vmatprep.subr.mxu0 0.0
    %375 = vmatpush1.xpose.msra.mxu0 0.0
    %376 = vmatprep.subr.mxu0 0.0
    %377 = vmatpush1.xpose.msra.mxu0 0.0
    %378 = vmatprep.subr.mxu0 0.0
    %379 = vmatpush1.xpose.msra.mxu0 0.0
    %380 = vmatprep.subr.mxu0 0.0
    %381 = vmatpush1.xpose.msra.mxu0 0.0
    %382 = vmatprep.subr.mxu0 0.0
    %383 = vmatpush1.xpose.msra.mxu0 0.0
    %384 = vmatprep.subr.mxu0 0.0
    %385 = vmatpush1.xpose.msra.mxu0 0.0
    %386 = vmatprep.subr.mxu0 0.0
    %387 = vmatpush1.xpose.msra.mxu0 0.0
    %388 = vmatprep.subr.mxu0 0.0
    %389 = vmatpush1.xpose.msra.mxu0 0.0
    %390 = vmatprep.subr.mxu0 0.0
    %391 = vmatpush1.xpose.msra.mxu0 0.0
    %392 = vmatprep.subr.mxu0 0.0
    %393 = vmatpush1.xpose.msra.mxu0 0.0
    %394 = vmatprep.subr.mxu0 0.0
    %395 = vmatpush1.xpose.msra.mxu0 0.0
    %396 = vmatprep.subr.mxu0 0.0
    %397 = vmatpush1.xpose.msra.mxu0 %v364
    %398 = vmatprep.subr.mxu0 0.0
    %399 = vmatpush2.xpose.msra.mxu0 0.0
    %400 = vmatprep.subr.mxu0 0.0
    %401 = vmatpush2.xpose.msra.mxu0 0.0
    %402 = vmatprep.subr.mxu0 0.0
    %403 = vmatpush2.xpose.msra.mxu0 0.0
    %404 = vmatprep.subr.mxu0 0.0
    %405 = vmatpush2.xpose.msra.mxu0 0.0
    %406 = vmatprep.subr.mxu0 0.0
    %407 = vmatpush2.xpose.msra.mxu0 0.0
    %408 = vmatprep.subr.mxu0 0.0
    %409 = vmatpush2.xpose.msra.mxu0 0.0
    %410 = vmatprep.subr.mxu0 0.0
    %411 = vmatpush2.xpose.msra.mxu0 0.0
    %412 = vmatprep.subr.mxu0 0.0
    %413 = vmatpush2.xpose.msra.mxu0 0.0
    %414 = vmatprep.subr.mxu0 0.0
    %415 = vmatpush2.xpose.msra.mxu0 0.0
    %416 = vmatprep.subr.mxu0 0.0
    %417 = vmatpush2.xpose.msra.mxu0 0.0
    %418 = vmatprep.subr.mxu0 0.0
    %419 = vmatpush2.xpose.msra.mxu0 0.0
    %420 = vmatprep.subr.mxu0 0.0
    %421 = vmatpush2.xpose.msra.mxu0 0.0
    %422 = vmatprep.subr.mxu0 0.0
    %423 = vmatpush2.xpose.msra.mxu0 0.0
    %424 = vmatprep.subr.mxu0 0.0
    %425 = vmatpush2.xpose.msra.mxu0 0.0
    %426 = vmatprep.subr.mxu0 0.0
    %427 = vmatpush2.xpose.msra.mxu0 0.0
    %428 = vmatprep.subr.mxu0 0.0
    %429 = vmatpush2.xpose.msra.mxu0 0.0
    %430 = vmatprep.mubr.f32.mxu0 0.0
    %431 = vmatmul.mubr.f32.gmra.mxu0 %v361
    %v432 = vpop.f32.mrf.mxu0
    %v433 = vadd.f32 0.0, %v432
    %v434 = vpop.f32.mrf.mxu0
    %435 = vdwg.mxu0
    %v437 = vsel %vm359, %v240, 0
    %v440 = vsel %vm359, %v356, 0
    %442 = vmatprep.subr.mxu0 0.0
    %443 = vmatpush1.xpose.msra.mxu0 0.0
    %444 = vmatprep.subr.mxu0 0.0
    %445 = vmatpush1.xpose.msra.mxu0 0.0
    %446 = vmatprep.subr.mxu0 0.0
    %447 = vmatpush1.xpose.msra.mxu0 0.0
    %448 = vmatprep.subr.mxu0 0.0
    %449 = vmatpush1.xpose.msra.mxu0 0.0
    %450 = vmatprep.subr.mxu0 0.0
    %451 = vmatpush1.xpose.msra.mxu0 0.0
    %452 = vmatprep.subr.mxu0 0.0
    %453 = vmatpush1.xpose.msra.mxu0 0.0
    %454 = vmatprep.subr.mxu0 0.0
    %455 = vmatpush1.xpose.msra.mxu0 0.0
    %456 = vmatprep.subr.mxu0 0.0
    %457 = vmatpush1.xpose.msra.mxu0 0.0
    %458 = vmatprep.subr.mxu0 0.0
    %459 = vmatpush1.xpose.msra.mxu0 0.0
    %460 = vmatprep.subr.mxu0 0.0
    %461 = vmatpush1.xpose.msra.mxu0 0.0
    %462 = vmatprep.subr.mxu0 0.0
    %463 = vmatpush1.xpose.msra.mxu0 0.0
    %464 = vmatprep.subr.mxu0 0.0
    %465 = vmatpush1.xpose.msra.mxu0 0.0
    %466 = vmatprep.subr.mxu0 0.0
    %467 = vmatpush1.xpose.msra.mxu0 0.0
    %468 = vmatprep.subr.mxu0 0.0
    %469 = vmatpush1.xpose.msra.mxu0 0.0
    %470 = vmatprep.subr.mxu0 0.0
    %471 = vmatpush1.xpose.msra.mxu0 0.0
    %472 = vmatprep.subr.mxu0 0.0
    %473 = vmatpush1.xpose.msra.mxu0 %v440
    %474 = vmatprep.subr.mxu0 0.0
    %475 = vmatpush2.xpose.msra.mxu0 0.0
    %476 = vmatprep.subr.mxu0 0.0
    %477 = vmatpush2.xpose.msra.mxu0 0.0
    %478 = vmatprep.subr.mxu0 0.0
    %479 = vmatpush2.xpose.msra.mxu0 0.0
    %480 = vmatprep.subr.mxu0 0.0
    %481 = vmatpush2.xpose.msra.mxu0 0.0
    %482 = vmatprep.subr.mxu0 0.0
    %483 = vmatpush2.xpose.msra.mxu0 0.0
    %484 = vmatprep.subr.mxu0 0.0
    %485 = vmatpush2.xpose.msra.mxu0 0.0
    %486 = vmatprep.subr.mxu0 0.0
    %487 = vmatpush2.xpose.msra.mxu0 0.0
    %488 = vmatprep.subr.mxu0 0.0
    %489 = vmatpush2.xpose.msra.mxu0 0.0
    %490 = vmatprep.subr.mxu0 0.0
    %491 = vmatpush2.xpose.msra.mxu0 0.0
    %492 = vmatprep.subr.mxu0 0.0
    %493 = vmatpush2.xpose.msra.mxu0 0.0
    %494 = vmatprep.subr.mxu0 0.0
    %495 = vmatpush2.xpose.msra.mxu0 0.0
    %496 = vmatprep.subr.mxu0 0.0
    %497 = vmatpush2.xpose.msra.mxu0 0.0
    %498 = vmatprep.subr.mxu0 0.0
    %499 = vmatpush2.xpose.msra.mxu0 0.0
    %500 = vmatprep.subr.mxu0 0.0
    %501 = vmatpush2.xpose.msra.mxu0 0.0
    %502 = vmatprep.subr.mxu0 0.0
    %503 = vmatpush2.xpose.msra.mxu0 0.0
    %504 = vmatprep.subr.mxu0 0.0
    %505 = vmatpush2.xpose.msra.mxu0 0.0
    %506 = vmatprep.mubr.f32.mxu0 0.0
    %507 = vmatmul.mubr.f32.gmra.mxu0 %v437
    %v508 = vpop.f32.mrf.mxu0
    %v509 = vadd.f32 0.0, %v508
    %v510 = vpop.f32.mrf.mxu0
    %511 = vdwg.mxu0
    %v514 = vlaneseq
    %v515 = vshrl.u32 %v514, 7
    %v516 = vsub.s32 0, %v515
    %v517 = vrot.slane %v357, %v516
    %v518 = vlaneseq
    %v519 = vshrl.u32 %v518, 7
    %v520 = vsub.s32 0, %v519
    %v521 = vrot.slane %v358, %v520
    %v524 = vmul.f32 %v433, %v517
    %v525 = vmul.f32 %v509, %v521
    %v526 = vsub.f32 %v357, 1.0
    %v527 = vsub.f32 %v358, 1.0
    %v528 = vmul.f32 %v526, 1e+13
    %v529 = vmul.f32 %v527, 1e+13
    %v532 = vlaneseq
    %v533 = vshrl.u32 %v532, 7
    %v534 = vsub.s32 0, %v533
    %v535 = vrot.slane %v528, %v534
    %v536 = vlaneseq
    %v537 = vshrl.u32 %v536, 7
    %v538 = vsub.s32 0, %v537
    %v539 = vrot.slane %v529, %v538
    %v542 = vadd.f32 %v524, %v535
    %v543 = vadd.f32 %v525, %v539
    %vm544 = vcmask 64512
    %v545 = vsel %vm544, %v542, -inf
    %546 = vmax.xlane.f32.xlu0 %v545
    %v547 = vpop.xlane.xlu0 %546
    %v548 = vsel %vm544, %v543, -inf
    %549 = vmax.xlane.f32.xlu0 %v548
    %v550 = vpop.xlane.xlu0 %549
    %v551 = vsub.f32 %v542, %v547
    %v552 = vsub.f32 %v543, %v550
    %v553 = vmul.f32 %v551, 1.442695
    %v554 = vpow.pop %v553
    %v555 = vmul.f32 %v552, 1.442695
    %v556 = vpow.pop %v555
    %v557 = vsel %vm544, %v554, 0.0
    %558 = vadd.xlane.f32.xlu0 %v557
    %v559 = vpop.xlane.xlu0 %558
    %v560 = vsel %vm544, %v556, 0.0
    %561 = vadd.xlane.f32.xlu0 %v560
    %v562 = vpop.xlane.xlu0 %561
    %v563 = vrcp.pop %v559
    %v564 = vrcp.pop %v562
    %v565 = vmul.f32 %v554, %v563
    %v566 = vmul.f32 %v556, %v564
    %v567 = vld [vmem:[%s2] sm:$0xff]
    %v568 = vld [vmem:[%s2 + $0x8] sm:$0xff]
    %v569 = vld [vmem:[#allocation5] sm:$0xff]
    %v570 = vld [vmem:[#allocation5 + $0x8] sm:$0xff]
    %v572 = vsel %vm544, %v565, 0
    %574 = vmatprep.subr.mxu0 0.0
    %575 = vmatpush1.msra.mxu0 0.0
    %576 = vmatprep.subr.mxu0 0.0
    %577 = vmatpush1.msra.mxu0 0.0
    %578 = vmatprep.subr.mxu0 0.0
    %579 = vmatpush1.msra.mxu0 0.0
    %580 = vmatprep.subr.mxu0 0.0
    %581 = vmatpush1.msra.mxu0 0.0
    %582 = vmatprep.subr.mxu0 0.0
    %583 = vmatpush1.msra.mxu0 0.0
    %584 = vmatprep.subr.mxu0 0.0
    %585 = vmatpush1.msra.mxu0 0.0
    %586 = vmatprep.subr.mxu0 0.0
    %587 = vmatpush1.msra.mxu0 0.0
    %588 = vmatprep.subr.mxu0 0.0
    %589 = vmatpush1.msra.mxu0 0.0
    %590 = vmatprep.subr.mxu0 0.0
    %591 = vmatpush1.msra.mxu0 0.0
    %592 = vmatprep.subr.mxu0 0.0
    %593 = vmatpush1.msra.mxu0 0.0
    %594 = vmatprep.subr.mxu0 0.0
    %595 = vmatpush1.msra.mxu0 0.0
    %596 = vmatprep.subr.mxu0 0.0
    %597 = vmatpush1.msra.mxu0 0.0
    %598 = vmatprep.subr.mxu0 0.0
    %599 = vmatpush1.msra.mxu0 0.0
    %600 = vmatprep.subr.mxu0 0.0
    %601 = vmatpush1.msra.mxu0 0.0
    %602 = vmatprep.subr.mxu0 0.0
    %603 = vmatpush1.msra.mxu0 0.0
    %604 = vmatprep.subr.mxu0 0.0
    %605 = vmatpush1.msra.mxu0 %v569
    %606 = vmatprep.subr.mxu0 0.0
    %607 = vmatpush2.msra.mxu0 0.0
    %608 = vmatprep.subr.mxu0 0.0
    %609 = vmatpush2.msra.mxu0 0.0
    %610 = vmatprep.subr.mxu0 0.0
    %611 = vmatpush2.msra.mxu0 0.0
    %612 = vmatprep.subr.mxu0 0.0
    %613 = vmatpush2.msra.mxu0 0.0
    %614 = vmatprep.subr.mxu0 0.0
    %615 = vmatpush2.msra.mxu0 0.0
    %616 = vmatprep.subr.mxu0 0.0
    %617 = vmatpush2.msra.mxu0 0.0
    %618 = vmatprep.subr.mxu0 0.0
    %619 = vmatpush2.msra.mxu0 0.0
    %620 = vmatprep.subr.mxu0 0.0
    %621 = vmatpush2.msra.mxu0 0.0
    %622 = vmatprep.subr.mxu0 0.0
    %623 = vmatpush2.msra.mxu0 0.0
    %624 = vmatprep.subr.mxu0 0.0
    %625 = vmatpush2.msra.mxu0 0.0
    %626 = vmatprep.subr.mxu0 0.0
    %627 = vmatpush2.msra.mxu0 0.0
    %628 = vmatprep.subr.mxu0 0.0
    %629 = vmatpush2.msra.mxu0 0.0
    %630 = vmatprep.subr.mxu0 0.0
    %631 = vmatpush2.msra.mxu0 0.0
    %632 = vmatprep.subr.mxu0 0.0
    %633 = vmatpush2.msra.mxu0 0.0
    %634 = vmatprep.subr.mxu0 0.0
    %635 = vmatpush2.msra.mxu0 0.0
    %636 = vmatprep.subr.mxu0 0.0
    %637 = vmatpush2.msra.mxu0 0.0
    %638 = vmatprep.mubr.f32.mxu0 0.0
    %639 = vmatmul.mubr.f32.gmra.mxu0 %v572
    %v640 = vpop.f32.mrf.mxu0
    %v641 = vadd.f32 0.0, %v640
    %v642 = vpop.f32.mrf.mxu0
    %643 = vdwg.mxu0
    %v645 = vsel %vm544, %v566, 0
    %647 = vmatprep.subr.mxu0 0.0
    %648 = vmatpush1.msra.mxu0 0.0
    %649 = vmatprep.subr.mxu0 0.0
    %650 = vmatpush1.msra.mxu0 0.0
    %651 = vmatprep.subr.mxu0 0.0
    %652 = vmatpush1.msra.mxu0 0.0
    %653 = vmatprep.subr.mxu0 0.0
    %654 = vmatpush1.msra.mxu0 0.0
    %655 = vmatprep.subr.mxu0 0.0
    %656 = vmatpush1.msra.mxu0 0.0
    %657 = vmatprep.subr.mxu0 0.0
    %658 = vmatpush1.msra.mxu0 0.0
    %659 = vmatprep.subr.mxu0 0.0
    %660 = vmatpush1.msra.mxu0 0.0
    %661 = vmatprep.subr.mxu0 0.0
    %662 = vmatpush1.msra.mxu0 0.0
    %663 = vmatprep.subr.mxu0 0.0
    %664 = vmatpush1.msra.mxu0 0.0
    %665 = vmatprep.subr.mxu0 0.0
    %666 = vmatpush1.msra.mxu0 0.0
    %667 = vmatprep.subr.mxu0 0.0
    %668 = vmatpush1.msra.mxu0 0.0
    %669 = vmatprep.subr.mxu0 0.0
    %670 = vmatpush1.msra.mxu0 0.0
    %671 = vmatprep.subr.mxu0 0.0
    %672 = vmatpush1.msra.mxu0 0.0
    %673 = vmatprep.subr.mxu0 0.0
    %674 = vmatpush1.msra.mxu0 0.0
    %675 = vmatprep.subr.mxu0 0.0
    %676 = vmatpush1.msra.mxu0 0.0
    %677 = vmatprep.subr.mxu0 0.0
    %678 = vmatpush1.msra.mxu0 %v570
    %679 = vmatprep.subr.mxu0 0.0
    %680 = vmatpush2.msra.mxu0 0.0
    %681 = vmatprep.subr.mxu0 0.0
    %682 = vmatpush2.msra.mxu0 0.0
    %683 = vmatprep.subr.mxu0 0.0
    %684 = vmatpush2.msra.mxu0 0.0
    %685 = vmatprep.subr.mxu0 0.0
    %686 = vmatpush2.msra.mxu0 0.0
    %687 = vmatprep.subr.mxu0 0.0
    %688 = vmatpush2.msra.mxu0 0.0
    %689 = vmatprep.subr.mxu0 0.0
    %690 = vmatpush2.msra.mxu0 0.0
    %691 = vmatprep.subr.mxu0 0.0
    %692 = vmatpush2.msra.mxu0 0.0
    %693 = vmatprep.subr.mxu0 0.0
    %694 = vmatpush2.msra.mxu0 0.0
    %695 = vmatprep.subr.mxu0 0.0
    %696 = vmatpush2.msra.mxu0 0.0
    %697 = vmatprep.subr.mxu0 0.0
    %698 = vmatpush2.msra.mxu0 0.0
    %699 = vmatprep.subr.mxu0 0.0
    %700 = vmatpush2.msra.mxu0 0.0
    %701 = vmatprep.subr.mxu0 0.0
    %702 = vmatpush2.msra.mxu0 0.0
    %703 = vmatprep.subr.mxu0 0.0
    %704 = vmatpush2.msra.mxu0 0.0
    %705 = vmatprep.subr.mxu0 0.0
    %706 = vmatpush2.msra.mxu0 0.0
    %707 = vmatprep.subr.mxu0 0.0
    %708 = vmatpush2.msra.mxu0 0.0
    %709 = vmatprep.subr.mxu0 0.0
    %710 = vmatpush2.msra.mxu0 0.0
    %711 = vmatprep.mubr.f32.mxu0 0.0
    %712 = vmatmul.mubr.f32.gmra.mxu0 %v645
    %v713 = vpop.f32.mrf.mxu0
    %v714 = vadd.f32 0.0, %v713
    %v715 = vpop.f32.mrf.mxu0
    %716 = vdwg.mxu0
    %718 = vset.pattern.permute.xlu0 0
    %719 = vperm.xlu0 %718, %v567
    %v720 = vpop.permute.xlu0 %719
    %723 = vset.pattern.permute.xlu0 0
    %724 = vperm.xlu0 %723, %v568
    %v725 = vpop.permute.xlu0 %724
    %v727 = vmul.f32 %v641, %v720
    %v728 = vmul.f32 %v714, %v725
    %v729 = vld [vmem:[%s0] sm:$0xff]
    %v730 = vld [vmem:[%s0 + $0x8] sm:$0xff]
    %733 = vrot.lane.b32.xlu0 %v729, 64
    %v734 = vpop.permute.xlu0 %733
    %735 = vrot.lane.b32.xlu0 %v730, 64
    %v736 = vpop.permute.xlu0 %735
    %v739 = vsel %vm141, %v727, %v734
    %v740 = vsel %vm141, %v728, %v736
    %v741 = vld [vmem:[#allocation11] sm:$0xff]
    %v742 = vld [vmem:[#allocation11 + $0x8] sm:$0xff]
    %v743 = vld [vmem:[#allocation11 + $0x10] sm:$0xff]
    %v744 = vld [vmem:[#allocation11 + $0x18] sm:$0xff]
    %v745 = vld [vmem:[#allocation11 + $0x20] sm:$0xff]
    %v746 = vld [vmem:[#allocation11 + $0x28] sm:$0xff]
    %v747 = vld [vmem:[#allocation11 + $0x30] sm:$0xff]
    %v748 = vld [vmem:[#allocation11 + $0x38] sm:$0xff]
    %v749 = vld [vmem:[#allocation11 + $0x40] sm:$0xff]
    %v750 = vld [vmem:[#allocation11 + $0x48] sm:$0xff]
    %v751 = vld [vmem:[#allocation11 + $0x50] sm:$0xff]
    %v752 = vld [vmem:[#allocation11 + $0x58] sm:$0xff]
    %v753 = vld [vmem:[#allocation11 + $0x60] sm:$0xff]
    %v754 = vld [vmem:[#allocation11 + $0x68] sm:$0xff]
    %v755 = vld [vmem:[#allocation11 + $0x70] sm:$0xff]
    %v756 = vld [vmem:[#allocation11 + $0x78] sm:$0xff]
    %v757 = vld [vmem:[%s11] sm:$0x1]
    %v759 = vlaneseq
    %v760 = vshrl.u32 %v759, 7
    %v761 = vsub.s32 0, %v760
    %v762 = vrot.slane %v757, %v761
    %764 = vmatprep.subr.mxu0 0.0
    %765 = vmatpush1.msra.mxu0 %v756
    %766 = vmatprep.subr.mxu0 0.0
    %767 = vmatpush1.msra.mxu0 %v755
    %768 = vmatprep.subr.mxu0 0.0
    %769 = vmatpush1.msra.mxu0 %v754
    %770 = vmatprep.subr.mxu0 0.0
    %771 = vmatpush1.msra.mxu0 %v753
    %772 = vmatprep.subr.mxu0 0.0
    %773 = vmatpush1.msra.mxu0 %v752
    %774 = vmatprep.subr.mxu0 0.0
    %775 = vmatpush1.msra.mxu0 %v751
    %776 = vmatprep.subr.mxu0 0.0
    %777 = vmatpush1.msra.mxu0 %v750
    %778 = vmatprep.subr.mxu0 0.0
    %779 = vmatpush1.msra.mxu0 %v749
    %780 = vmatprep.subr.mxu0 0.0
    %781 = vmatpush1.msra.mxu0 %v748
    %782 = vmatprep.subr.mxu0 0.0
    %783 = vmatpush1.msra.mxu0 %v747
    %784 = vmatprep.subr.mxu0 0.0
    %785 = vmatpush1.msra.mxu0 %v746
    %786 = vmatprep.subr.mxu0 0.0
    %787 = vmatpush1.msra.mxu0 %v745
    %788 = vmatprep.subr.mxu0 0.0
    %789 = vmatpush1.msra.mxu0 %v744
    %790 = vmatprep.subr.mxu0 0.0
    %791 = vmatpush1.msra.mxu0 %v743
    %792 = vmatprep.subr.mxu0 0.0
    %793 = vmatpush1.msra.mxu0 %v742
    %794 = vmatprep.subr.mxu0 0.0
    %795 = vmatpush1.msra.mxu0 %v741
    %796 = vmatprep.subr.mxu0 0.0
    %797 = vmatpush2.msra.mxu0 0.0
    %798 = vmatprep.subr.mxu0 0.0
    %799 = vmatpush2.msra.mxu0 0.0
    %800 = vmatprep.subr.mxu0 0.0
    %801 = vmatpush2.msra.mxu0 0.0
    %802 = vmatprep.subr.mxu0 0.0
    %803 = vmatpush2.msra.mxu0 0.0
    %804 = vmatprep.subr.mxu0 0.0
    %805 = vmatpush2.msra.mxu0 0.0
    %806 = vmatprep.subr.mxu0 0.0
    %807 = vmatpush2.msra.mxu0 0.0
    %808 = vmatprep.subr.mxu0 0.0
    %809 = vmatpush2.msra.mxu0 0.0
    %810 = vmatprep.subr.mxu0 0.0
    %811 = vmatpush2.msra.mxu0 0.0
    %812 = vmatprep.subr.mxu0 0.0
    %813 = vmatpush2.msra.mxu0 0.0
    %814 = vmatprep.subr.mxu0 0.0
    %815 = vmatpush2.msra.mxu0 0.0
    %816 = vmatprep.subr.mxu0 0.0
    %817 = vmatpush2.msra.mxu0 0.0
    %818 = vmatprep.subr.mxu0 0.0
    %819 = vmatpush2.msra.mxu0 0.0
    %820 = vmatprep.subr.mxu0 0.0
    %821 = vmatpush2.msra.mxu0 0.0
    %822 = vmatprep.subr.mxu0 0.0
    %823 = vmatpush2.msra.mxu0 0.0
    %824 = vmatprep.subr.mxu0 0.0
    %825 = vmatpush2.msra.mxu0 0.0
    %826 = vmatprep.subr.mxu0 0.0
    %827 = vmatpush2.msra.mxu0 0.0
    %828 = vmatprep.mubr.f32.mxu0 0.0
    %829 = vmatmul.mubr.f32.gmra.mxu0 %v739
    %v830 = vpop.f32.mrf.mxu0
    %v831 = vadd.f32 %v762, %v830
    %v832 = vpop.f32.mrf.mxu0
    %833 = vmatprep.mubr.f32.mxu0 0.0
    %834 = vmatmul.mubr.f32.gmra.mxu0 %v740
    %v835 = vpop.f32.mrf.mxu0
    %v836 = vadd.f32 %v762, %v835
    %v837 = vpop.f32.mrf.mxu0
    %838 = vdwg.mxu0
    %v839 = vxor.u32 %v831, 2147483648
    %v840 = vxor.u32 %v836, 2147483648
    %v841 = vmul.f32 %v839, 1.442695
    %v842 = vpow.pop %v841
    %v843 = vmul.f32 %v840, 1.442695
    %v844 = vpow.pop %v843
    %v845 = vadd.f32 %v842, 1.0
    %v846 = vadd.f32 %v844, 1.0
    %v847 = vrcp.pop %v845
    %v848 = vmul.f32 1.0, %v847
    %v849 = vrcp.pop %v846
    %v850 = vmul.f32 1.0, %v849
    %v851 = vmul.f32 %v848, %v739
    %v852 = vmul.f32 %v850, %v740
    %853 = vst [vmem:[#allocation13] sm:$0xff] %v851
    %854 = vst [vmem:[#allocation13 + $0x8] sm:$0xff] %v852
    // Predicated region
    $region74: #{tpu_custom_call.1} parent=1 // pred_check
      _
    $region75: #{tpu_custom_call.1} parent=1 // pred_check_branch
      %856 = sbr.rel (0) target = $region77
    $region76: #{tpu_custom_call.1} parent=1 // pred_region
      %s858 = ssub.s32 256, 256
      %859 = vsyncadd [#allocation4], %s858
      %s860 = sshll.u32 [#allocation13], 4
      %s861 = int_to_ptr.vmem [resolvable:$true] %s860
      %866 = dma.vmem_to_hbm [thread:$0]  %s861, 256, %s12, [#allocation4], 128, 128, 8
    $region77: #{tpu_custom_call.1} parent=1 // pred_fallthru
      _
    // Predicated region
    $region78: #{tpu_custom_call.1} parent=1 // pred_check
      _
    $region79: #{tpu_custom_call.1} parent=1 // pred_check_branch
      %868 = sbr.rel (0) target = $region81
    $region80: #{tpu_custom_call.1} parent=1 // pred_region
      %869 = dma.done [#allocation4], 256
    $region81: #{tpu_custom_call.1} parent=1 // pred_fallthru
      _
    %870 = vsyncpa [#allocation3], 1
    %871 = vsyncpa [#allocation6], 1
    %872 = vsyncpa [#allocation9], 1
    %873 = vsyncpa [#allocation12], 1
    %874 = vsyncpa [#allocation4], 1

</llo_original>
